<compile_context>
chip_gen: v7x
topology: tpu7x:2x2x1
jax: 0.10.0
libtpu: 0.0.40
codegen_flags: <defaults>
</compile_context>

<pallas_src>
import functools
import math

import jax
import jax.numpy as jnp
from jax import lax
from jax.experimental import pallas as pl
from jax.experimental.pallas import tpu as pltpu

VERY_SMALL_NUMBER = 1e-12
LANE = 128


# ------------------------------ small helpers ------------------------------ #

def _round_up(v, m):
    return ((v + m - 1) // m) * m


def _pad2(a, shape, dtype):
    a = a.astype(dtype)
    return jnp.pad(a, [(0, s - d) for d, s in zip(a.shape, shape)])


# ------------------------------ Pallas kernel ------------------------------ #

def _make_fused_kernel(num_layers, gsc, nclass):
    """Fused AnchorGCN2 forward (all layers) on whole-in-VMEM operands."""
    gsc = float(gsc)
    one_minus_gsc = 1.0 - gsc

    def kernel(x_ref, ana_ref, ann_ref, *rest):
        w_refs = rest[:num_layers]
        first_ref, initagg_ref, node_ref, out_ref = rest[num_layers:]

        # ---- adjacency normalization: hoisted, computed ONCE per forward ----
        ana = ana_ref[...]                                        # [Np, Ap] f32
        inv_col = pl.reciprocal(
            jnp.maximum(jnp.sum(ana, axis=0, keepdims=True), VERY_SMALL_NUMBER),
            approx=True)                                          # EUP, not VALU
        inv_row = pl.reciprocal(
            jnp.maximum(jnp.sum(ana, axis=1, keepdims=True), VERY_SMALL_NUMBER),
            approx=True)
        node_norm = (ana * inv_col).astype(jnp.bfloat16)          # [Np, Ap]
        anchor_norm = (ana * inv_row).astype(jnp.bfloat16)        # [Np, Ap]
        ann = ann_ref[...]                                        # [Np, Np] bf16 input

        # Contract over axis 0 of node_norm (== node_norm^T @ support) with no
        # explicit transpose — MXU takes the transposed LHS natively.
        dn_anchor = (((0,), (0,)), ((), ()))

        h = x_ref[...]                                            # f32 activations
        for layer in range(num_layers):
            if layer == num_layers - 1:
                # node_vec returned by the module == input to the last encoder.
                node_ref[...] = h

            w = w_refs[layer][...]                                # bf16 weight
            support_bf = jnp.dot(
                h.astype(jnp.bfloat16), w,
                preferred_element_type=jnp.float32).astype(jnp.bfloat16)  # [Np,Hp]

            # anchor message passing: anchor_norm @ (node_norm^T @ support)
            anchor_agg = lax.dot_general(
                node_norm, support_bf, dn_anchor,
                preferred_element_type=jnp.float32)               # [Ap, Hp] (tiny)
            # init-adjacency path (anchor_mp=False)
            init_out = jnp.dot(ann, support_bf,
                               preferred_element_type=jnp.float32)  # [Np, Hp]

            if layer == 0:
                # Unfolded path: the returned first_vec / init_agg_vec must be
                # the unscaled layer-0 aggregates.
                mp_out = jnp.dot(anchor_norm, anchor_agg.astype(jnp.bfloat16),
                                 preferred_element_type=jnp.float32)
                first_ref[...] = mp_out
                initagg_ref[...] = init_out
                blended = one_minus_gsc * mp_out + gsc * init_out
            else:
                # Fold (1-gsc) into the tiny [Ap,Hp] anchor aggregate, saving an
                # N*H f32 multiply per layer.
                mp_out = jnp.dot(
                    anchor_norm, (one_minus_gsc * anchor_agg).astype(jnp.bfloat16),
                    preferred_element_type=jnp.float32)
                blended = mp_out + gsc * init_out

            if layer < num_layers - 1:
                # relu; dropout is identity in eval mode.
                h = jnp.maximum(blended, 0.0)
            else:
                # log_softmax masked to the real (unpadded) class lanes.
                lane = lax.broadcasted_iota(jnp.int32, blended.shape, 1)
                z = jnp.where(lane < nclass, blended, -1e30)
                m = jnp.max(z, axis=-1, keepdims=True)
                zz = z - m
                lse = jnp.log(jnp.sum(jnp.exp(zz), axis=-1, keepdims=True))
                out_ref[...] = zz - lse
                # NOTE: padded class lanes hold garbage; wrapper slices them off.

    return kernel


# --------------------------------- wrapper ---------------------------------- #

@functools.partial(jax.jit, static_argnames=("graph_skip_conn",))
def anchor_gcn2_forward(weights, x, init_adj, cur_node_anchor_adj,
                        sampled_node_idx, *, graph_skip_conn):
    """first=True, eval-mode forward of AnchorGCN2.

    Returns (first_vec, init_agg_vec, node_vec, output) like the PyTorch module.
    NOTE: anchor_vec = node_vec[sampled_node_idx] is computed but never returned
    by the PyTorch forward, so the gather is dropped here (dead code).
    """
    del sampled_node_idx  # kept for API parity only
    n, nfeat = x.shape
    a = cur_node_anchor_adj.shape[1]
    num_layers = len(weights)
    nhid = weights[0].shape[1]
    nclass = weights[-1].shape[1]

    # Lane-dense padding: every contracted / output axis (including the node
    # axis, since init_adj is [N, N]) is padded to a multiple of 128.
    # Zero padding is exact for this math.
    n_pad = _round_up(n, LANE)
    f_pad = _round_up(nfeat, LANE)
    h_pad = _round_up(nhid, LANE)
    c_pad = _round_up(nclass, LANE)
    a_pad = _round_up(a, LANE)

    x_p = _pad2(x, (n_pad, f_pad), jnp.float32)
    # node-anchor adj stays f32 (small, keeps the normalization sums exact);
    # init_adj (the N^2 operand) and the weights go in as bf16.
    ana_p = _pad2(cur_node_anchor_adj, (n_pad, a_pad), jnp.float32)
    ann_p = _pad2(init_adj, (n_pad, n_pad), jnp.bfloat16)

    dims_in = [f_pad] + [h_pad] * (num_layers - 1)
    dims_out = [h_pad] * (num_layers - 1) + [c_pad]
    w_p = [_pad2(w, (di, do), jnp.bfloat16)
           for w, di, do in zip(weights, dims_in, dims_out)]

    # Scoped-VMEM budget from padded footprints (inputs + outputs + live
    # intermediates), with headroom; clamped to v7x's 64 MiB physical VMEM.
    footprint = (
        n_pad * f_pad * 4                      # x (f32)
        + n_pad * a_pad * 4                    # node-anchor adj (f32)
        + n_pad * n_pad * 2                    # init_adj (bf16)
        + sum(di * do * 2 for di, do in zip(dims_in, dims_out))  # weights (bf16)
        + 3 * n_pad * h_pad * 4 + n_pad * c_pad * 4              # outputs (f32)
        + 4 * n_pad * max(h_pad, f_pad) * 4    # live f32 N*H temporaries
        + 2 * n_pad * a_pad * 2                # node_norm / anchor_norm (bf16)
        + a_pad * max(h_pad, c_pad) * 4        # anchor_agg (f32)
    )
    vmem_limit = int(min(max(2 * footprint, 8 * 1024 * 1024), 64 * 1024 * 1024))

    kern = _make_fused_kernel(num_layers, graph_skip_conn, nclass)
    vmem = pl.BlockSpec(memory_space=pltpu.MemorySpace.VMEM)
    out_shape = (
        jax.ShapeDtypeStruct((n_pad, h_pad), jnp.float32),   # first_vec
        jax.ShapeDtypeStruct((n_pad, h_pad), jnp.float32),   # init_agg_vec
        jax.ShapeDtypeStruct((n_pad, h_pad), jnp.float32),   # node_vec
        jax.ShapeDtypeStruct((n_pad, c_pad), jnp.float32),   # output (log-probs)
    )
    first_p, initagg_p, node_p, out_p = pl.pallas_call(
        kern,
        out_shape=out_shape,
        in_specs=[vmem] * (3 + num_layers),
        out_specs=(vmem,) * 4,
        compiler_params=pltpu.CompilerParams(vmem_limit_bytes=vmem_limit),
    )(x_p, ana_p, ann_p, *w_p)

    first_vec = first_p[:n, :nhid]
    init_agg_vec = initagg_p[:n, :nhid]
    node_vec = node_p[:n, :nhid]
    output = out_p[:n, :nclass]
    return first_vec, init_agg_vec, node_vec, output


# --------------------------- pure-JAX f32 reference -------------------------- #

def anchor_gcn2_reference(weights, x, init_adj, ana, gsc):
    col = jnp.maximum(jnp.sum(ana, axis=0, keepdims=True), VERY_SMALL_NUMBER)
    row = jnp.maximum(jnp.sum(ana, axis=1, keepdims=True), VERY_SMALL_NUMBER)
    node_norm = ana / col
    anchor_norm = ana / row

    def anchor_mp(support):
        return anchor_norm @ (node_norm.T @ support)

    s0 = x @ weights[0]
    first_vec = anchor_mp(s0)
    init_agg_vec = init_adj @ s0
    node_vec = jax.nn.relu((1.0 - gsc) * first_vec + gsc * init_agg_vec)
    for w in weights[1:-1]:
        s = node_vec @ w
        node_vec = jax.nn.relu((1.0 - gsc) * anchor_mp(s) + gsc * (init_adj @ s))
    s = node_vec @ weights[-1]
    logits = (1.0 - gsc) * anchor_mp(s) + gsc * (init_adj @ s)
    output = jax.nn.log_softmax(logits, axis=-1)
    return first_vec, init_agg_vec, node_vec, output


# ------------------------------- param init --------------------------------- #

def xavier_uniform(key, fan_in, fan_out):
    bound = math.sqrt(6.0 / (fan_in + fan_out))
    return jax.random.uniform(key, (fan_in, fan_out), jnp.float32, -bound, bound)


# ---------------------------------- main ------------------------------------ #

if __name__ == "__main__":
    key = jax.random.PRNGKey(0)

    # small shapes: N nodes, A anchors
    N, A = 16, 8
    nfeat, nhid, nclass = 32, 32, 8
    graph_hops = 3          # layers: nfeat->nhid, nhid->nhid, nhid->nclass
    graph_skip_conn = 0.3
    dropout = 0.5           # eval mode => identity

    keys = jax.random.split(key, graph_hops + 3)
    dims = [nfeat] + [nhid] * (graph_hops - 1) + [nclass]
    weights = [xavier_uniform(keys[i], dims[i], dims[i + 1])
               for i in range(graph_hops)]

    x = jax.random.normal(keys[graph_hops], (N, nfeat), jnp.float32)
    # row-stochastic-ish init adjacency [N, N]
    init_adj = jax.nn.softmax(
        jax.random.normal(keys[graph_hops + 1], (N, N), jnp.float32), axis=-1)
    # non-negative node-anchor adjacency [N, A]
    cur_node_anchor_adj = (
        jax.nn.relu(jax.random.normal(keys[graph_hops + 2], (N, A), jnp.float32))
        + 0.1)
    sampled_node_idx = jnp.arange(A, dtype=jnp.int32)

    outs = anchor_gcn2_forward(weights, x, init_adj, cur_node_anchor_adj,
                               sampled_node_idx,
                               graph_skip_conn=graph_skip_conn)
    outs = jax.block_until_ready(outs)

    # Correctness check vs. pure-JAX f32 reference (bf16-MXU tolerance).
    refs = anchor_gcn2_reference(weights, x, init_adj, cur_node_anchor_adj,
                                 graph_skip_conn)
    for name, got, ref in zip(("first_vec", "init_agg_vec", "node_vec", "output"),
                              outs, refs):
        assert got.shape == ref.shape, (name, got.shape, ref.shape)
        assert bool(jnp.allclose(got, ref, rtol=5e-2, atol=5e-2)), name

    print("KERNEL_OK")
</pallas_src>

<mosaic_0001>
module attributes {stable_mosaic.version = 11 : i64} {
  func.func @kernel(%arg0: memref<128x128xf32, #tpu.memory_space<vmem>>, %arg1: memref<128x128xf32, #tpu.memory_space<vmem>>, %arg2: memref<128x128xbf16, #tpu.memory_space<vmem>>, %arg3: memref<128x128xbf16, #tpu.memory_space<vmem>>, %arg4: memref<128x128xbf16, #tpu.memory_space<vmem>>, %arg5: memref<128x128xbf16, #tpu.memory_space<vmem>>, %arg6: memref<128x128xf32, #tpu.memory_space<vmem>>, %arg7: memref<128x128xf32, #tpu.memory_space<vmem>>, %arg8: memref<128x128xf32, #tpu.memory_space<vmem>>, %arg9: memref<128x128xf32, #tpu.memory_space<vmem>>) attributes {dimension_semantics = [], scalar_prefetch = 0 : i64, scratch_operands = 0 : i64, tpu.core_type = #tpu.core_type<tc>} {
    %c0 = arith.constant 0 : index
    %c0_0 = arith.constant 0 : index
    %0 = vector.load %arg1[%c0, %c0_0] : memref<128x128xf32, #tpu.memory_space<vmem>>, vector<128x128xf32>
    %cst = arith.constant dense<0.000000e+00> : vector<128xf32>
    %1 = vector.multi_reduction <add>, %0, %cst [0] : vector<128x128xf32> to vector<128xf32>
    %2 = vector.shape_cast %1 : vector<128xf32> to vector<1x128xf32>
    %cst_1 = arith.constant 9.99999996E-13 : f32
    %3 = vector.broadcast %cst_1 : f32 to vector<1x128xf32>
    %4 = arith.maximumf %2, %3 : vector<1x128xf32>
    %5 = tpu.reciprocal %4 {approx = true} : vector<1x128xf32> -> vector<1x128xf32>
    %cst_2 = arith.constant dense<0.000000e+00> : vector<128xf32>
    %6 = vector.multi_reduction <add>, %0, %cst_2 [1] : vector<128x128xf32> to vector<128xf32>
    %7 = vector.shape_cast %6 : vector<128xf32> to vector<128x1xf32>
    %cst_3 = arith.constant 9.99999996E-13 : f32
    %8 = vector.broadcast %cst_3 : f32 to vector<128x1xf32>
    %9 = arith.maximumf %7, %8 : vector<128x1xf32>
    %10 = tpu.reciprocal %9 {approx = true} : vector<128x1xf32> -> vector<128x1xf32>
    %11 = vector.broadcast %5 : vector<1x128xf32> to vector<128x128xf32>
    %12 = arith.mulf %0, %11 : vector<128x128xf32>
    %13 = arith.truncf %12 : vector<128x128xf32> to vector<128x128xbf16>
    %14 = vector.broadcast %10 : vector<128x1xf32> to vector<128x128xf32>
    %15 = arith.mulf %0, %14 : vector<128x128xf32>
    %16 = arith.truncf %15 : vector<128x128xf32> to vector<128x128xbf16>
    %c0_4 = arith.constant 0 : index
    %c0_5 = arith.constant 0 : index
    %17 = vector.load %arg2[%c0_4, %c0_5] : memref<128x128xbf16, #tpu.memory_space<vmem>>, vector<128x128xbf16>
    %c0_6 = arith.constant 0 : index
    %c0_7 = arith.constant 0 : index
    %18 = vector.load %arg0[%c0_6, %c0_7] : memref<128x128xf32, #tpu.memory_space<vmem>>, vector<128x128xf32>
    %c0_8 = arith.constant 0 : index
    %c0_9 = arith.constant 0 : index
    %19 = vector.load %arg3[%c0_8, %c0_9] : memref<128x128xbf16, #tpu.memory_space<vmem>>, vector<128x128xbf16>
    %20 = arith.truncf %18 : vector<128x128xf32> to vector<128x128xbf16>
    %cst_10 = arith.constant dense<0.000000e+00> : vector<128x128xf32>
    %21 = tpu.matmul %20, %19, %cst_10 {dimension_numbers = #tpu.dot_dimension_numbers<[1], [0], [0], [1], [0, 0, 1, 1], [], []>} : vector<128x128xbf16>, vector<128x128xbf16>, vector<128x128xf32> -> vector<128x128xf32>
    %22 = arith.truncf %21 : vector<128x128xf32> to vector<128x128xbf16>
    %cst_11 = arith.constant dense<0.000000e+00> : vector<128x128xf32>
    %23 = tpu.matmul %13, %22, %cst_11 {dimension_numbers = #tpu.dot_dimension_numbers<[0], [0], [1], [1], [0, 1, 1, 1], [], []>} : vector<128x128xbf16>, vector<128x128xbf16>, vector<128x128xf32> -> vector<128x128xf32>
    %cst_12 = arith.constant dense<0.000000e+00> : vector<128x128xf32>
    %24 = tpu.matmul %17, %22, %cst_12 {dimension_numbers = #tpu.dot_dimension_numbers<[1], [0], [0], [1], [0, 0, 1, 1], [], []>} : vector<128x128xbf16>, vector<128x128xbf16>, vector<128x128xf32> -> vector<128x128xf32>
    %25 = arith.truncf %23 : vector<128x128xf32> to vector<128x128xbf16>
    %cst_13 = arith.constant dense<0.000000e+00> : vector<128x128xf32>
    %26 = tpu.matmul %16, %25, %cst_13 {dimension_numbers = #tpu.dot_dimension_numbers<[1], [0], [0], [1], [0, 0, 1, 1], [], []>} : vector<128x128xbf16>, vector<128x128xbf16>, vector<128x128xf32> -> vector<128x128xf32>
    %c0_14 = arith.constant 0 : index
    %c0_15 = arith.constant 0 : index
    %27 = vector.load %arg6[%c0_14, %c0_15] : memref<128x128xf32, #tpu.memory_space<vmem>>, vector<128x128xf32>
    tpu.vector_store %arg6[%c0_14, %c0_15], %26 {strides = array<i32>} : memref<128x128xf32, #tpu.memory_space<vmem>>, vector<128x128xf32>,
    %c0_16 = arith.constant 0 : index
    %c0_17 = arith.constant 0 : index
    %28 = vector.load %arg7[%c0_16, %c0_17] : memref<128x128xf32, #tpu.memory_space<vmem>>, vector<128x128xf32>
    tpu.vector_store %arg7[%c0_16, %c0_17], %24 {strides = array<i32>} : memref<128x128xf32, #tpu.memory_space<vmem>>, vector<128x128xf32>,
    %cst_18 = arith.constant 0.699999988 : f32
    %29 = vector.broadcast %cst_18 : f32 to vector<128x128xf32>
    %30 = arith.mulf %29, %26 : vector<128x128xf32>
    %cst_19 = arith.constant 3.000000e-01 : f32
    %31 = vector.broadcast %cst_19 : f32 to vector<128x128xf32>
    %32 = arith.mulf %31, %24 : vector<128x128xf32>
    %33 = arith.addf %30, %32 : vector<128x128xf32>
    %cst_20 = arith.constant 0.000000e+00 : f32
    %34 = vector.broadcast %cst_20 : f32 to vector<128x128xf32>
    %35 = arith.maximumf %33, %34 : vector<128x128xf32>
    %c0_21 = arith.constant 0 : index
    %c0_22 = arith.constant 0 : index
    %36 = vector.load %arg4[%c0_21, %c0_22] : memref<128x128xbf16, #tpu.memory_space<vmem>>, vector<128x128xbf16>
    %37 = arith.truncf %35 : vector<128x128xf32> to vector<128x128xbf16>
    %cst_23 = arith.constant dense<0.000000e+00> : vector<128x128xf32>
    %38 = tpu.matmul %37, %36, %cst_23 {dimension_numbers = #tpu.dot_dimension_numbers<[1], [0], [0], [1], [0, 0, 1, 1], [], []>} : vector<128x128xbf16>, vector<128x128xbf16>, vector<128x128xf32> -> vector<128x128xf32>
    %39 = arith.truncf %38 : vector<128x128xf32> to vector<128x128xbf16>
    %cst_24 = arith.constant dense<0.000000e+00> : vector<128x128xf32>
    %40 = tpu.matmul %13, %39, %cst_24 {dimension_numbers = #tpu.dot_dimension_numbers<[0], [0], [1], [1], [0, 1, 1, 1], [], []>} : vector<128x128xbf16>, vector<128x128xbf16>, vector<128x128xf32> -> vector<128x128xf32>
    %cst_25 = arith.constant dense<0.000000e+00> : vector<128x128xf32>
    %41 = tpu.matmul %17, %39, %cst_25 {dimension_numbers = #tpu.dot_dimension_numbers<[1], [0], [0], [1], [0, 0, 1, 1], [], []>} : vector<128x128xbf16>, vector<128x128xbf16>, vector<128x128xf32> -> vector<128x128xf32>
    %cst_26 = arith.constant 0.699999988 : f32
    %42 = vector.broadcast %cst_26 : f32 to vector<128x128xf32>
    %43 = arith.mulf %42, %40 : vector<128x128xf32>
    %44 = arith.truncf %43 : vector<128x128xf32> to vector<128x128xbf16>
    %cst_27 = arith.constant dense<0.000000e+00> : vector<128x128xf32>
    %45 = tpu.matmul %16, %44, %cst_27 {dimension_numbers = #tpu.dot_dimension_numbers<[1], [0], [0], [1], [0, 0, 1, 1], [], []>} : vector<128x128xbf16>, vector<128x128xbf16>, vector<128x128xf32> -> vector<128x128xf32>
    %cst_28 = arith.constant 3.000000e-01 : f32
    %46 = vector.broadcast %cst_28 : f32 to vector<128x128xf32>
    %47 = arith.mulf %46, %41 : vector<128x128xf32>
    %48 = arith.addf %45, %47 : vector<128x128xf32>
    %cst_29 = arith.constant 0.000000e+00 : f32
    %49 = vector.broadcast %cst_29 : f32 to vector<128x128xf32>
    %50 = arith.maximumf %48, %49 : vector<128x128xf32>
    %c0_30 = arith.constant 0 : index
    %c0_31 = arith.constant 0 : index
    %51 = vector.load %arg8[%c0_30, %c0_31] : memref<128x128xf32, #tpu.memory_space<vmem>>, vector<128x128xf32>
    tpu.vector_store %arg8[%c0_30, %c0_31], %50 {strides = array<i32>} : memref<128x128xf32, #tpu.memory_space<vmem>>, vector<128x128xf32>,
    %c0_32 = arith.constant 0 : index
    %c0_33 = arith.constant 0 : index
    %52 = vector.load %arg5[%c0_32, %c0_33] : memref<128x128xbf16, #tpu.memory_space<vmem>>, vector<128x128xbf16>
    %53 = arith.truncf %50 : vector<128x128xf32> to vector<128x128xbf16>
    %cst_34 = arith.constant dense<0.000000e+00> : vector<128x128xf32>
    %54 = tpu.matmul %53, %52, %cst_34 {dimension_numbers = #tpu.dot_dimension_numbers<[1], [0], [0], [1], [0, 0, 1, 1], [], []>} : vector<128x128xbf16>, vector<128x128xbf16>, vector<128x128xf32> -> vector<128x128xf32>
    %55 = arith.truncf %54 : vector<128x128xf32> to vector<128x128xbf16>
    %cst_35 = arith.constant dense<0.000000e+00> : vector<128x128xf32>
    %56 = tpu.matmul %13, %55, %cst_35 {dimension_numbers = #tpu.dot_dimension_numbers<[0], [0], [1], [1], [0, 1, 1, 1], [], []>} : vector<128x128xbf16>, vector<128x128xbf16>, vector<128x128xf32> -> vector<128x128xf32>
    %cst_36 = arith.constant dense<0.000000e+00> : vector<128x128xf32>
    %57 = tpu.matmul %17, %55, %cst_36 {dimension_numbers = #tpu.dot_dimension_numbers<[1], [0], [0], [1], [0, 0, 1, 1], [], []>} : vector<128x128xbf16>, vector<128x128xbf16>, vector<128x128xf32> -> vector<128x128xf32>
    %cst_37 = arith.constant 0.699999988 : f32
    %58 = vector.broadcast %cst_37 : f32 to vector<128x128xf32>
    %59 = arith.mulf %58, %56 : vector<128x128xf32>
    %60 = arith.truncf %59 : vector<128x128xf32> to vector<128x128xbf16>
    %cst_38 = arith.constant dense<0.000000e+00> : vector<128x128xf32>
    %61 = tpu.matmul %16, %60, %cst_38 {dimension_numbers = #tpu.dot_dimension_numbers<[1], [0], [0], [1], [0, 0, 1, 1], [], []>} : vector<128x128xbf16>, vector<128x128xbf16>, vector<128x128xf32> -> vector<128x128xf32>
    %cst_39 = arith.constant 3.000000e-01 : f32
    %62 = vector.broadcast %cst_39 : f32 to vector<128x128xf32>
    %63 = arith.mulf %62, %57 : vector<128x128xf32>
    %64 = arith.addf %61, %63 : vector<128x128xf32>
    %65 = tpu.iota {dimensions = array<i32: 1>} : vector<128x128xi32>
    %c8_i32 = arith.constant 8 : i32
    %66 = vector.broadcast %c8_i32 : i32 to vector<128x128xi32>
    %67 = arith.cmpi slt, %65, %66 : vector<128x128xi32>
    %cst_40 = arith.constant -1.000000e+30 : f32
    %68 = vector.broadcast %cst_40 : f32 to vector<128x128xf32>
    %69 = arith.select %67, %64, %68 : vector<128x128xi1>, vector<128x128xf32>
    %cst_41 = arith.constant dense<0xFF800000> : vector<128xf32>
    %70 = vector.multi_reduction <maximumf>, %69, %cst_41 [1] : vector<128x128xf32> to vector<128xf32>
    %71 = vector.shape_cast %70 : vector<128xf32> to vector<128x1xf32>
    %72 = vector.broadcast %71 : vector<128x1xf32> to vector<128x128xf32>
    %73 = arith.subf %69, %72 : vector<128x128xf32>
    %74 = math.exp %73 : vector<128x128xf32>
    %cst_42 = arith.constant dense<0.000000e+00> : vector<128xf32>
    %75 = vector.multi_reduction <add>, %74, %cst_42 [1] : vector<128x128xf32> to vector<128xf32>
    %76 = vector.shape_cast %75 : vector<128xf32> to vector<128x1xf32>
    %77 = math.log %76 : vector<128x1xf32>
    %78 = vector.broadcast %77 : vector<128x1xf32> to vector<128x128xf32>
    %79 = arith.subf %73, %78 : vector<128x128xf32>
    %c0_43 = arith.constant 0 : index
    %c0_44 = arith.constant 0 : index
    %80 = vector.load %arg9[%c0_43, %c0_44] : memref<128x128xf32, #tpu.memory_space<vmem>>, vector<128x128xf32>
    tpu.vector_store %arg9[%c0_43, %c0_44], %79 {strides = array<i32>} : memref<128x128xf32, #tpu.memory_space<vmem>>, vector<128x128xf32>,
    return
  }
}

</mosaic_0001>

<llo_original>
// kernel: anchor_gcn2_forward.1
$region0: #{anchor_gcn2_forward.1}
  #allocation0 [shape = 'u32[]', space=smem, size = 0x4, offset = 0x4, fixed_abs, tag = 'smem constant byte address 0x4 - core index']
  #allocation1 [shape = 'u32[144,128]{1,0:T(1,128)}', space=vmem, size = 0x12000, scoped, tag = 'internal scratch']
  %s0 = inlined_call_operand.vmem [shape: f32[128,128], index: 0, kind: input, shape index: {}]
  %s1 = inlined_call_operand.vmem [shape: f32[128,128], index: 1, kind: input, shape index: {}]
  %s2 = inlined_call_operand.vmem [shape: bf16[128,128], index: 2, kind: input, shape index: {}]
  %s3 = inlined_call_operand.vmem [shape: bf16[128,128], index: 3, kind: input, shape index: {}]
  %s4 = inlined_call_operand.vmem [shape: bf16[128,128], index: 4, kind: input, shape index: {}]
  %s5 = inlined_call_operand.vmem [shape: bf16[128,128], index: 5, kind: input, shape index: {}]
  %s6 = inlined_call_operand.vmem [shape: f32[128,128], index: 6, kind: output, shape index: {0}]
  %s7 = inlined_call_operand.vmem [shape: f32[128,128], index: 7, kind: output, shape index: {1}]
  %s8 = inlined_call_operand.vmem [shape: f32[128,128], index: 8, kind: output, shape index: {2}]
  %s9 = inlined_call_operand.vmem [shape: f32[128,128], index: 9, kind: output, shape index: {3}]
  %10 = xla_tuple %s6, %s7, %s8, %s9
  %s11 = sld [smem:[#allocation0]]
  $region58: #{anchor_gcn2_forward.1} parent=0
    _
  %s13 = ssub.s32 1, %s11
  %s14 = scalar_select 0, %s13, %s11
  // Predicated region
  $region2: #{anchor_gcn2_forward.1} parent=0 // pred_check
    _
  $region3: #{anchor_gcn2_forward.1} parent=0 // pred_check_branch
    %16 = sbr.rel (0) target = $region5
  $region4: #{anchor_gcn2_forward.1} parent=0 // pred_region
    _
  $region5: #{anchor_gcn2_forward.1} parent=0 // pred_fallthru
    _
  // Predicated region
  $region6: #{anchor_gcn2_forward.1} parent=0 // pred_check
    _
  $region7: #{anchor_gcn2_forward.1} parent=0 // pred_check_branch
    %18 = sbr.rel (0) target = $region9
  $region8: #{anchor_gcn2_forward.1} parent=0 // pred_region
    _
  $region9: #{anchor_gcn2_forward.1} parent=0 // pred_fallthru
    _
  // Predicated region
  $region10: #{anchor_gcn2_forward.1} parent=0 // pred_check
    _
  $region11: #{anchor_gcn2_forward.1} parent=0 // pred_check_branch
    %20 = sbr.rel (0) target = $region13
  $region12: #{anchor_gcn2_forward.1} parent=0 // pred_region
    _
  $region13: #{anchor_gcn2_forward.1} parent=0 // pred_fallthru
    _
  // Predicated region
  $region14: #{anchor_gcn2_forward.1} parent=0 // pred_check
    _
  $region15: #{anchor_gcn2_forward.1} parent=0 // pred_check_branch
    %22 = sbr.rel (0) target = $region17
  $region16: #{anchor_gcn2_forward.1} parent=0 // pred_region
    _
  $region17: #{anchor_gcn2_forward.1} parent=0 // pred_fallthru
    _
  // Predicated region
  $region18: #{anchor_gcn2_forward.1} parent=0 // pred_check
    _
  $region19: #{anchor_gcn2_forward.1} parent=0 // pred_check_branch
    %24 = sbr.rel (0) target = $region21
  $region20: #{anchor_gcn2_forward.1} parent=0 // pred_region
    _
  $region21: #{anchor_gcn2_forward.1} parent=0 // pred_fallthru
    _
  // Predicated region
  $region22: #{anchor_gcn2_forward.1} parent=0 // pred_check
    _
  $region23: #{anchor_gcn2_forward.1} parent=0 // pred_check_branch
    %26 = sbr.rel (0) target = $region25
  $region24: #{anchor_gcn2_forward.1} parent=0 // pred_region
    _
  $region25: #{anchor_gcn2_forward.1} parent=0 // pred_fallthru
    _
  %v28 = vld [vmem:[%s1] sm:$0xff]
  %v29 = vld [vmem:[%s1 + $0x8] sm:$0xff]
  %v30 = vld [vmem:[%s1 + $0x10] sm:$0xff]
  %v31 = vld [vmem:[%s1 + $0x18] sm:$0xff]
  %v32 = vld [vmem:[%s1 + $0x20] sm:$0xff]
  %v33 = vld [vmem:[%s1 + $0x28] sm:$0xff]
  %v34 = vld [vmem:[%s1 + $0x30] sm:$0xff]
  %v35 = vld [vmem:[%s1 + $0x38] sm:$0xff]
  %v36 = vld [vmem:[%s1 + $0x40] sm:$0xff]
  %v37 = vld [vmem:[%s1 + $0x48] sm:$0xff]
  %v38 = vld [vmem:[%s1 + $0x50] sm:$0xff]
  %v39 = vld [vmem:[%s1 + $0x58] sm:$0xff]
  %v40 = vld [vmem:[%s1 + $0x60] sm:$0xff]
  %v41 = vld [vmem:[%s1 + $0x68] sm:$0xff]
  %v42 = vld [vmem:[%s1 + $0x70] sm:$0xff]
  %v43 = vld [vmem:[%s1 + $0x78] sm:$0xff]
  %v44 = vadd.f32 %v28, %v29
  %v45 = vadd.f32 %v44, %v30
  %v46 = vadd.f32 %v45, %v31
  %v47 = vadd.f32 %v46, %v32
  %v48 = vadd.f32 %v47, %v33
  %v49 = vadd.f32 %v48, %v34
  %v50 = vadd.f32 %v49, %v35
  %v51 = vadd.f32 %v50, %v36
  %v52 = vadd.f32 %v51, %v37
  %v53 = vadd.f32 %v52, %v38
  %v54 = vadd.f32 %v53, %v39
  %v55 = vadd.f32 %v54, %v40
  %v56 = vadd.f32 %v55, %v41
  %v57 = vadd.f32 %v56, %v42
  %v58 = vadd.f32 %v57, %v43
  %v59 = vrot.slane %v58, 4
  %v60 = vadd.f32 %v58, %v59
  %v61 = vrot.slane %v60, 2
  %v62 = vadd.f32 %v60, %v61
  %v63 = vrot.slane %v62, 1
  %v64 = vadd.f32 %v62, %v63
  %v65 = vmax.f32 %v64, 1e-12
  %v66 = vrcp.pop %v65
  %67 = vadd.xlane.f32.xlu0 %v28
  %v68 = vpop.xlane.xlu0 %67
  %69 = vadd.xlane.f32.xlu0 %v29
  %v70 = vpop.xlane.xlu0 %69
  %71 = vadd.xlane.f32.xlu0 %v30
  %v72 = vpop.xlane.xlu0 %71
  %73 = vadd.xlane.f32.xlu0 %v31
  %v74 = vpop.xlane.xlu0 %73
  %75 = vadd.xlane.f32.xlu0 %v32
  %v76 = vpop.xlane.xlu0 %75
  %77 = vadd.xlane.f32.xlu0 %v33
  %v78 = vpop.xlane.xlu0 %77
  %79 = vadd.xlane.f32.xlu0 %v34
  %v80 = vpop.xlane.xlu0 %79
  %81 = vadd.xlane.f32.xlu0 %v35
  %v82 = vpop.xlane.xlu0 %81
  %83 = vadd.xlane.f32.xlu0 %v36
  %v84 = vpop.xlane.xlu0 %83
  %85 = vadd.xlane.f32.xlu0 %v37
  %v86 = vpop.xlane.xlu0 %85
  %87 = vadd.xlane.f32.xlu0 %v38
  %v88 = vpop.xlane.xlu0 %87
  %89 = vadd.xlane.f32.xlu0 %v39
  %v90 = vpop.xlane.xlu0 %89
  %91 = vadd.xlane.f32.xlu0 %v40
  %v92 = vpop.xlane.xlu0 %91
  %93 = vadd.xlane.f32.xlu0 %v41
  %v94 = vpop.xlane.xlu0 %93
  %95 = vadd.xlane.f32.xlu0 %v42
  %v96 = vpop.xlane.xlu0 %95
  %97 = vadd.xlane.f32.xlu0 %v43
  %v98 = vpop.xlane.xlu0 %97
  %v99 = vmax.f32 %v68, 1e-12
  %v100 = vmax.f32 %v70, 1e-12
  %v101 = vmax.f32 %v72, 1e-12
  %v102 = vmax.f32 %v74, 1e-12
  %v103 = vmax.f32 %v76, 1e-12
  %v104 = vmax.f32 %v78, 1e-12
  %v105 = vmax.f32 %v80, 1e-12
  %v106 = vmax.f32 %v82, 1e-12
  %v107 = vmax.f32 %v84, 1e-12
  %v108 = vmax.f32 %v86, 1e-12
  %v109 = vmax.f32 %v88, 1e-12
  %v110 = vmax.f32 %v90, 1e-12
  %v111 = vmax.f32 %v92, 1e-12
  %v112 = vmax.f32 %v94, 1e-12
  %v113 = vmax.f32 %v96, 1e-12
  %v114 = vmax.f32 %v98, 1e-12
  %v115 = vrcp.pop %v99
  %v116 = vrcp.pop %v100
  %v117 = vrcp.pop %v101
  %v118 = vrcp.pop %v102
  %v119 = vrcp.pop %v103
  %v120 = vrcp.pop %v104
  %v121 = vrcp.pop %v105
  %v122 = vrcp.pop %v106
  %v123 = vrcp.pop %v107
  %v124 = vrcp.pop %v108
  %v125 = vrcp.pop %v109
  %v126 = vrcp.pop %v110
  %v127 = vrcp.pop %v111
  %v128 = vrcp.pop %v112
  %v129 = vrcp.pop %v113
  %v130 = vrcp.pop %v114
  %v131 = vmul.f32 %v28, %v66
  %v132 = vmul.f32 %v29, %v66
  %v133 = vmul.f32 %v30, %v66
  %v134 = vmul.f32 %v31, %v66
  %v135 = vmul.f32 %v32, %v66
  %v136 = vmul.f32 %v33, %v66
  %v137 = vmul.f32 %v34, %v66
  %v138 = vmul.f32 %v35, %v66
  %v139 = vmul.f32 %v36, %v66
  %v140 = vmul.f32 %v37, %v66
  %v141 = vmul.f32 %v38, %v66
  %v142 = vmul.f32 %v39, %v66
  %v143 = vmul.f32 %v40, %v66
  %v144 = vmul.f32 %v41, %v66
  %v145 = vmul.f32 %v42, %v66
  %v146 = vmul.f32 %v43, %v66
  %v147 = vpack.c.bf16 %v132, %v131
  %v148 = vpack.c.bf16 %v134, %v133
  %v149 = vpack.c.bf16 %v136, %v135
  %v150 = vpack.c.bf16 %v138, %v137
  %v151 = vpack.c.bf16 %v140, %v139
  %v152 = vpack.c.bf16 %v142, %v141
  %v153 = vpack.c.bf16 %v144, %v143
  %v154 = vpack.c.bf16 %v146, %v145
  %v155 = vmul.f32 %v28, %v115
  %v156 = vmul.f32 %v29, %v116
  %v157 = vmul.f32 %v30, %v117
  %v158 = vmul.f32 %v31, %v118
  %v159 = vmul.f32 %v32, %v119
  %v160 = vmul.f32 %v33, %v120
  %v161 = vmul.f32 %v34, %v121
  %v162 = vmul.f32 %v35, %v122
  %v163 = vmul.f32 %v36, %v123
  %v164 = vmul.f32 %v37, %v124
  %v165 = vmul.f32 %v38, %v125
  %v166 = vmul.f32 %v39, %v126
  %v167 = vmul.f32 %v40, %v127
  %v168 = vmul.f32 %v41, %v128
  %v169 = vmul.f32 %v42, %v129
  %v170 = vmul.f32 %v43, %v130
  %v171 = vpack.c.bf16 %v156, %v155
  %v172 = vpack.c.bf16 %v158, %v157
  %v173 = vpack.c.bf16 %v160, %v159
  %v174 = vpack.c.bf16 %v162, %v161
  %v175 = vpack.c.bf16 %v164, %v163
  %v176 = vpack.c.bf16 %v166, %v165
  %v177 = vpack.c.bf16 %v168, %v167
  %v178 = vpack.c.bf16 %v170, %v169
  %v179 = vld [vmem:[%s2] sm:$0xf]
  %v180 = vld [vmem:[%s2 + $0x4] sm:$0xf]
  %v181 = vld [vmem:[%s2 + $0x8] sm:$0xf]
  %v182 = vld [vmem:[%s2 + $0xc] sm:$0xf]
  %v183 = vld [vmem:[%s2 + $0x10] sm:$0xf]
  %v184 = vld [vmem:[%s2 + $0x14] sm:$0xf]
  %v185 = vld [vmem:[%s2 + $0x18] sm:$0xf]
  %v186 = vld [vmem:[%s2 + $0x1c] sm:$0xf]
  %v187 = vld [vmem:[%s2 + $0x20] sm:$0xf]
  %v188 = vld [vmem:[%s2 + $0x24] sm:$0xf]
  %v189 = vld [vmem:[%s2 + $0x28] sm:$0xf]
  %v190 = vld [vmem:[%s2 + $0x2c] sm:$0xf]
  %v191 = vld [vmem:[%s2 + $0x30] sm:$0xf]
  %v192 = vld [vmem:[%s2 + $0x34] sm:$0xf]
  %v193 = vld [vmem:[%s2 + $0x38] sm:$0xf]
  %v194 = vld [vmem:[%s2 + $0x3c] sm:$0xf]
  %v195 = vld [vmem:[%s0] sm:$0xff]
  %v196 = vld [vmem:[%s0 + $0x8] sm:$0xff]
  %v197 = vld [vmem:[%s0 + $0x10] sm:$0xff]
  %v198 = vld [vmem:[%s0 + $0x18] sm:$0xff]
  %v199 = vld [vmem:[%s0 + $0x20] sm:$0xff]
  %v200 = vld [vmem:[%s0 + $0x28] sm:$0xff]
  %v201 = vld [vmem:[%s0 + $0x30] sm:$0xff]
  %v202 = vld [vmem:[%s0 + $0x38] sm:$0xff]
  %v203 = vld [vmem:[%s0 + $0x40] sm:$0xff]
  %v204 = vld [vmem:[%s0 + $0x48] sm:$0xff]
  %v205 = vld [vmem:[%s0 + $0x50] sm:$0xff]
  %v206 = vld [vmem:[%s0 + $0x58] sm:$0xff]
  %v207 = vld [vmem:[%s0 + $0x60] sm:$0xff]
  %v208 = vld [vmem:[%s0 + $0x68] sm:$0xff]
  %v209 = vld [vmem:[%s0 + $0x70] sm:$0xff]
  %v210 = vld [vmem:[%s0 + $0x78] sm:$0xff]
  %v211 = vld [vmem:[%s3] sm:$0xf]
  %v212 = vld [vmem:[%s3 + $0x4] sm:$0xf]
  %v213 = vld [vmem:[%s3 + $0x8] sm:$0xf]
  %v214 = vld [vmem:[%s3 + $0xc] sm:$0xf]
  %v215 = vld [vmem:[%s3 + $0x10] sm:$0xf]
  %v216 = vld [vmem:[%s3 + $0x14] sm:$0xf]
  %v217 = vld [vmem:[%s3 + $0x18] sm:$0xf]
  %v218 = vld [vmem:[%s3 + $0x1c] sm:$0xf]
  %v219 = vld [vmem:[%s3 + $0x20] sm:$0xf]
  %v220 = vld [vmem:[%s3 + $0x24] sm:$0xf]
  %v221 = vld [vmem:[%s3 + $0x28] sm:$0xf]
  %v222 = vld [vmem:[%s3 + $0x2c] sm:$0xf]
  %v223 = vld [vmem:[%s3 + $0x30] sm:$0xf]
  %v224 = vld [vmem:[%s3 + $0x34] sm:$0xf]
  %v225 = vld [vmem:[%s3 + $0x38] sm:$0xf]
  %v226 = vld [vmem:[%s3 + $0x3c] sm:$0xf]
  %v227 = vpack.c.bf16 %v196, %v195
  %v228 = vpack.c.bf16 %v198, %v197
  %v229 = vpack.c.bf16 %v200, %v199
  %v230 = vpack.c.bf16 %v202, %v201
  %v231 = vpack.c.bf16 %v204, %v203
  %v232 = vpack.c.bf16 %v206, %v205
  %v233 = vpack.c.bf16 %v208, %v207
  %v234 = vpack.c.bf16 %v210, %v209
  %v251 = vunpack.c.l.b16 %v211
  %v252 = vunpack.c.l.b16 %v212
  %v253 = vunpack.c.l.b16 %v213
  %v254 = vunpack.c.l.b16 %v214
  %v255 = vunpack.c.l.b16 %v215
  %v256 = vunpack.c.l.b16 %v216
  %v257 = vunpack.c.l.b16 %v217
  %v258 = vunpack.c.l.b16 %v218
  %v259 = vunpack.c.l.b16 %v219
  %v260 = vunpack.c.l.b16 %v220
  %v261 = vunpack.c.l.b16 %v221
  %v262 = vunpack.c.l.b16 %v222
  %v263 = vunpack.c.l.b16 %v223
  %v264 = vunpack.c.l.b16 %v224
  %v265 = vunpack.c.l.b16 %v225
  %v266 = vunpack.c.l.b16 %v226
  %v267 = vpack.c.b16 %v252, %v251
  %v268 = vpack.c.b16 %v254, %v253
  %v269 = vpack.c.b16 %v256, %v255
  %v270 = vpack.c.b16 %v258, %v257
  %v271 = vpack.c.b16 %v260, %v259
  %v272 = vpack.c.b16 %v262, %v261
  %v273 = vpack.c.b16 %v264, %v263
  %v274 = vpack.c.b16 %v266, %v265
  %283 = vmatprep.subr.bf16.mxu0 0
  %284 = vmatpush1.bf16.msra.mxu0 %v267
  %285 = vmatprep.subr.bf16.mxu0 0
  %286 = vmatpush1.bf16.msra.mxu0 %v268
  %287 = vmatprep.subr.bf16.mxu0 0
  %288 = vmatpush1.bf16.msra.mxu0 %v269
  %289 = vmatprep.subr.bf16.mxu0 0
  %290 = vmatpush1.bf16.msra.mxu0 %v270
  %291 = vmatprep.subr.bf16.mxu0 0
  %292 = vmatpush1.bf16.msra.mxu0 %v271
  %293 = vmatprep.subr.bf16.mxu0 0
  %294 = vmatpush1.bf16.msra.mxu0 %v272
  %295 = vmatprep.subr.bf16.mxu0 0
  %296 = vmatpush1.bf16.msra.mxu0 %v273
  %297 = vmatprep.subr.bf16.mxu0 0
  %298 = vmatpush1.bf16.msra.mxu0 %v274
  %299 = vmatprep.subr.bf16.mxu0 0
  %300 = vmatpush1.bf16.msra.mxu0 0
  %301 = vmatprep.subr.bf16.mxu0 0
  %302 = vmatpush1.bf16.msra.mxu0 0
  %303 = vmatprep.subr.bf16.mxu0 0
  %304 = vmatpush1.bf16.msra.mxu0 0
  %305 = vmatprep.subr.bf16.mxu0 0
  %306 = vmatpush1.bf16.msra.mxu0 0
  %307 = vmatprep.subr.bf16.mxu0 0
  %308 = vmatpush1.bf16.msra.mxu0 0
  %309 = vmatprep.subr.bf16.mxu0 0
  %310 = vmatpush1.bf16.msra.mxu0 0
  %311 = vmatprep.subr.bf16.mxu0 0
  %312 = vmatpush1.bf16.msra.mxu0 0
  %313 = vmatprep.subr.bf16.mxu0 0
  %314 = vmatpush1.bf16.msra.mxu0 0
  %315 = vmatprep.mubr.bf16.mxu0 0
  %316 = vmatmul.mubr.bf16.gmra.mrb[0].mxu0 %v227
  %v317 = vpop.f32.mrb[0].mxu0
  %v318 = vadd.f32 0.0, %v317
  %v319 = vpop.f32.mrb[0].mxu0
  %v320 = vpop.f32.mrb[0].mxu0
  %v321 = vadd.f32 0.0, %v320
  %v322 = vpop.f32.mrb[0].mxu0
  %323 = vmatprep.mubr.bf16.mxu0 0
  %324 = vmatmul.mubr.bf16.gmra.mrb[0].mxu0 %v228
  %v325 = vpop.f32.mrb[0].mxu0
  %v326 = vadd.f32 0.0, %v325
  %v327 = vpop.f32.mrb[0].mxu0
  %v328 = vpop.f32.mrb[0].mxu0
  %v329 = vadd.f32 0.0, %v328
  %v330 = vpop.f32.mrb[0].mxu0
  %331 = vmatprep.mubr.bf16.mxu0 0
  %332 = vmatmul.mubr.bf16.gmra.mrb[0].mxu0 %v229
  %v333 = vpop.f32.mrb[0].mxu0
  %v334 = vadd.f32 0.0, %v333
  %v335 = vpop.f32.mrb[0].mxu0
  %v336 = vpop.f32.mrb[0].mxu0
  %v337 = vadd.f32 0.0, %v336
  %v338 = vpop.f32.mrb[0].mxu0
  %339 = vmatprep.mubr.bf16.mxu0 0
  %340 = vmatmul.mubr.bf16.gmra.mrb[0].mxu0 %v230
  %v341 = vpop.f32.mrb[0].mxu0
  %v342 = vadd.f32 0.0, %v341
  %v343 = vpop.f32.mrb[0].mxu0
  %v344 = vpop.f32.mrb[0].mxu0
  %v345 = vadd.f32 0.0, %v344
  %v346 = vpop.f32.mrb[0].mxu0
  %347 = vmatprep.mubr.bf16.mxu0 0
  %348 = vmatmul.mubr.bf16.gmra.mrb[0].mxu0 %v231
  %v349 = vpop.f32.mrb[0].mxu0
  %v350 = vadd.f32 0.0, %v349
  %v351 = vpop.f32.mrb[0].mxu0
  %v352 = vpop.f32.mrb[0].mxu0
  %v353 = vadd.f32 0.0, %v352
  %v354 = vpop.f32.mrb[0].mxu0
  %355 = vmatprep.mubr.bf16.mxu0 0
  %356 = vmatmul.mubr.bf16.gmra.mrb[0].mxu0 %v232
  %v357 = vpop.f32.mrb[0].mxu0
  %v358 = vadd.f32 0.0, %v357
  %v359 = vpop.f32.mrb[0].mxu0
  %v360 = vpop.f32.mrb[0].mxu0
  %v361 = vadd.f32 0.0, %v360
  %v362 = vpop.f32.mrb[0].mxu0
  %363 = vmatprep.mubr.bf16.mxu0 0
  %364 = vmatmul.mubr.bf16.gmra.mrb[0].mxu0 %v233
  %v365 = vpop.f32.mrb[0].mxu0
  %v366 = vadd.f32 0.0, %v365
  %v367 = vpop.f32.mrb[0].mxu0
  %v368 = vpop.f32.mrb[0].mxu0
  %v369 = vadd.f32 0.0, %v368
  %v370 = vpop.f32.mrb[0].mxu0
  %371 = vmatprep.mubr.bf16.mxu0 0
  %372 = vmatmul.mubr.bf16.gmra.mrb[0].mxu0 %v234
  %v373 = vpop.f32.mrb[0].mxu0
  %v374 = vadd.f32 0.0, %v373
  %v375 = vpop.f32.mrb[0].mxu0
  %v376 = vpop.f32.mrb[0].mxu0
  %v377 = vadd.f32 0.0, %v376
  %v378 = vpop.f32.mrb[0].mxu0
  %379 = vdwg.mxu0
  %v380 = vpack.c.bf16 %v321, %v318
  %v381 = vpack.c.bf16 %v329, %v326
  %v382 = vpack.c.bf16 %v337, %v334
  %v383 = vpack.c.bf16 %v345, %v342
  %v384 = vpack.c.bf16 %v353, %v350
  %v385 = vpack.c.bf16 %v361, %v358
  %v386 = vpack.c.bf16 %v369, %v366
  %v387 = vpack.c.bf16 %v377, %v374
  %388 = vxpose.xlu0.c.b16.start [1/8] %v147, 128
  %389 = vxpose.xlu0.c.b16.cont [2/8] %v148, 128
  %390 = vxpose.xlu0.c.b16.cont [3/8] %v149, 128
  %391 = vxpose.xlu0.c.b16.cont [4/8] %v150, 128
  %392 = vxpose.xlu0.c.b16.cont [5/8] %v151, 128
  %393 = vxpose.xlu0.c.b16.cont [6/8] %v152, 128
  %394 = vxpose.xlu0.c.b16.cont [7/8] %v153, 128
  %395 = vxpose.xlu0.c.b16.end [8/8] %v154, 128
  %v396 = vpop.trf.xlu0
  %v397 = vpop.trf.xlu0
  %v398 = vpop.trf.xlu0
  %v399 = vpop.trf.xlu0
  %v400 = vpop.trf.xlu0
  %v401 = vpop.trf.xlu0
  %v402 = vpop.trf.xlu0
  %v403 = vpop.trf.xlu0
  %404 = vmatprep.subr.bf16.mxu0 0
  %405 = vmatpush1.bf16.msra.mxu0 %v380
  %406 = vmatprep.subr.bf16.mxu0 0
  %407 = vmatpush1.bf16.msra.mxu0 %v381
  %408 = vmatprep.subr.bf16.mxu0 0
  %409 = vmatpush1.bf16.msra.mxu0 %v382
  %410 = vmatprep.subr.bf16.mxu0 0
  %411 = vmatpush1.bf16.msra.mxu0 %v383
  %412 = vmatprep.subr.bf16.mxu0 0
  %413 = vmatpush1.bf16.msra.mxu0 %v384
  %414 = vmatprep.subr.bf16.mxu0 0
  %415 = vmatpush1.bf16.msra.mxu0 %v385
  %416 = vmatprep.subr.bf16.mxu0 0
  %417 = vmatpush1.bf16.msra.mxu0 %v386
  %418 = vmatprep.subr.bf16.mxu0 0
  %419 = vmatpush1.bf16.msra.mxu0 %v387
  %420 = vmatprep.subr.bf16.mxu0 0
  %421 = vmatpush1.bf16.msra.mxu0 0
  %422 = vmatprep.subr.bf16.mxu0 0
  %423 = vmatpush1.bf16.msra.mxu0 0
  %424 = vmatprep.subr.bf16.mxu0 0
  %425 = vmatpush1.bf16.msra.mxu0 0
  %426 = vmatprep.subr.bf16.mxu0 0
  %427 = vmatpush1.bf16.msra.mxu0 0
  %428 = vmatprep.subr.bf16.mxu0 0
  %429 = vmatpush1.bf16.msra.mxu0 0
  %430 = vmatprep.subr.bf16.mxu0 0
  %431 = vmatpush1.bf16.msra.mxu0 0
  %432 = vmatprep.subr.bf16.mxu0 0
  %433 = vmatpush1.bf16.msra.mxu0 0
  %434 = vmatprep.subr.bf16.mxu0 0
  %435 = vmatpush1.bf16.msra.mxu0 0
  %436 = vmatprep.mubr.bf16.mxu0 0
  %437 = vmatmul.mubr.bf16.gmra.mrb[0].mxu0 %v396
  %v438 = vpop.f32.mrb[0].mxu0
  %v439 = vadd.f32 0.0, %v438
  %v440 = vpop.f32.mrb[0].mxu0
  %v441 = vpop.f32.mrb[0].mxu0
  %v442 = vadd.f32 0.0, %v441
  %v443 = vpop.f32.mrb[0].mxu0
  %444 = vmatprep.mubr.bf16.mxu0 0
  %445 = vmatmul.mubr.bf16.gmra.mrb[0].mxu0 %v397
  %v446 = vpop.f32.mrb[0].mxu0
  %v447 = vadd.f32 0.0, %v446
  %v448 = vpop.f32.mrb[0].mxu0
  %v449 = vpop.f32.mrb[0].mxu0
  %v450 = vadd.f32 0.0, %v449
  %v451 = vpop.f32.mrb[0].mxu0
  %452 = vmatprep.mubr.bf16.mxu0 0
  %453 = vmatmul.mubr.bf16.gmra.mrb[0].mxu0 %v398
  %v454 = vpop.f32.mrb[0].mxu0
  %v455 = vadd.f32 0.0, %v454
  %v456 = vpop.f32.mrb[0].mxu0
  %v457 = vpop.f32.mrb[0].mxu0
  %v458 = vadd.f32 0.0, %v457
  %v459 = vpop.f32.mrb[0].mxu0
  %460 = vmatprep.mubr.bf16.mxu0 0
  %461 = vmatmul.mubr.bf16.gmra.mrb[0].mxu0 %v399
  %v462 = vpop.f32.mrb[0].mxu0
  %v463 = vadd.f32 0.0, %v462
  %v464 = vpop.f32.mrb[0].mxu0
  %v465 = vpop.f32.mrb[0].mxu0
  %v466 = vadd.f32 0.0, %v465
  %v467 = vpop.f32.mrb[0].mxu0
  %468 = vmatprep.mubr.bf16.mxu0 0
  %469 = vmatmul.mubr.bf16.gmra.mrb[0].mxu0 %v400
  %v470 = vpop.f32.mrb[0].mxu0
  %v471 = vadd.f32 0.0, %v470
  %v472 = vpop.f32.mrb[0].mxu0
  %v473 = vpop.f32.mrb[0].mxu0
  %v474 = vadd.f32 0.0, %v473
  %v475 = vpop.f32.mrb[0].mxu0
  %476 = vmatprep.mubr.bf16.mxu0 0
  %477 = vmatmul.mubr.bf16.gmra.mrb[0].mxu0 %v401
  %v478 = vpop.f32.mrb[0].mxu0
  %v479 = vadd.f32 0.0, %v478
  %v480 = vpop.f32.mrb[0].mxu0
  %v481 = vpop.f32.mrb[0].mxu0
  %v482 = vadd.f32 0.0, %v481
  %v483 = vpop.f32.mrb[0].mxu0
  %484 = vmatprep.mubr.bf16.mxu0 0
  %485 = vmatmul.mubr.bf16.gmra.mrb[0].mxu0 %v402
  %v486 = vpop.f32.mrb[0].mxu0
  %v487 = vadd.f32 0.0, %v486
  %v488 = vpop.f32.mrb[0].mxu0
  %v489 = vpop.f32.mrb[0].mxu0
  %v490 = vadd.f32 0.0, %v489
  %v491 = vpop.f32.mrb[0].mxu0
  %492 = vmatprep.mubr.bf16.mxu0 0
  %493 = vmatmul.mubr.bf16.gmra.mrb[0].mxu0 %v403
  %v494 = vpop.f32.mrb[0].mxu0
  %v495 = vadd.f32 0.0, %v494
  %v496 = vpop.f32.mrb[0].mxu0
  %v497 = vpop.f32.mrb[0].mxu0
  %v498 = vadd.f32 0.0, %v497
  %v499 = vpop.f32.mrb[0].mxu0
  %500 = vdwg.mxu0
  %v517 = vunpack.c.l.b16 %v179
  %v518 = vunpack.c.l.b16 %v180
  %v519 = vunpack.c.l.b16 %v181
  %v520 = vunpack.c.l.b16 %v182
  %v521 = vunpack.c.l.b16 %v183
  %v522 = vunpack.c.l.b16 %v184
  %v523 = vunpack.c.l.b16 %v185
  %v524 = vunpack.c.l.b16 %v186
  %v525 = vunpack.c.l.b16 %v187
  %v526 = vunpack.c.l.b16 %v188
  %v527 = vunpack.c.l.b16 %v189
  %v528 = vunpack.c.l.b16 %v190
  %v529 = vunpack.c.l.b16 %v191
  %v530 = vunpack.c.l.b16 %v192
  %v531 = vunpack.c.l.b16 %v193
  %v532 = vunpack.c.l.b16 %v194
  %v533 = vpack.c.b16 %v518, %v517
  %v534 = vpack.c.b16 %v520, %v519
  %v535 = vpack.c.b16 %v522, %v521
  %v536 = vpack.c.b16 %v524, %v523
  %v537 = vpack.c.b16 %v526, %v525
  %v538 = vpack.c.b16 %v528, %v527
  %v539 = vpack.c.b16 %v530, %v529
  %v540 = vpack.c.b16 %v532, %v531
  %549 = vmatprep.subr.bf16.mxu0 0
  %550 = vmatpush1.bf16.msra.mxu0 %v380
  %551 = vmatprep.subr.bf16.mxu0 0
  %552 = vmatpush1.bf16.msra.mxu0 %v381
  %553 = vmatprep.subr.bf16.mxu0 0
  %554 = vmatpush1.bf16.msra.mxu0 %v382
  %555 = vmatprep.subr.bf16.mxu0 0
  %556 = vmatpush1.bf16.msra.mxu0 %v383
  %557 = vmatprep.subr.bf16.mxu0 0
  %558 = vmatpush1.bf16.msra.mxu0 %v384
  %559 = vmatprep.subr.bf16.mxu0 0
  %560 = vmatpush1.bf16.msra.mxu0 %v385
  %561 = vmatprep.subr.bf16.mxu0 0
  %562 = vmatpush1.bf16.msra.mxu0 %v386
  %563 = vmatprep.subr.bf16.mxu0 0
  %564 = vmatpush1.bf16.msra.mxu0 %v387
  %565 = vmatprep.subr.bf16.mxu0 0
  %566 = vmatpush1.bf16.msra.mxu0 0
  %567 = vmatprep.subr.bf16.mxu0 0
  %568 = vmatpush1.bf16.msra.mxu0 0
  %569 = vmatprep.subr.bf16.mxu0 0
  %570 = vmatpush1.bf16.msra.mxu0 0
  %571 = vmatprep.subr.bf16.mxu0 0
  %572 = vmatpush1.bf16.msra.mxu0 0
  %573 = vmatprep.subr.bf16.mxu0 0
  %574 = vmatpush1.bf16.msra.mxu0 0
  %575 = vmatprep.subr.bf16.mxu0 0
  %576 = vmatpush1.bf16.msra.mxu0 0
  %577 = vmatprep.subr.bf16.mxu0 0
  %578 = vmatpush1.bf16.msra.mxu0 0
  %579 = vmatprep.subr.bf16.mxu0 0
  %580 = vmatpush1.bf16.msra.mxu0 0
  %581 = vmatprep.mubr.bf16.mxu0 0
  %582 = vmatmul.mubr.bf16.gmra.mrb[0].mxu0 %v533
  %v583 = vpop.f32.mrb[0].mxu0
  %v584 = vadd.f32 0.0, %v583
  %v585 = vpop.f32.mrb[0].mxu0
  %v586 = vpop.f32.mrb[0].mxu0
  %v587 = vadd.f32 0.0, %v586
  %v588 = vpop.f32.mrb[0].mxu0
  %589 = vmatprep.mubr.bf16.mxu0 0
  %590 = vmatmul.mubr.bf16.gmra.mrb[0].mxu0 %v534
  %v591 = vpop.f32.mrb[0].mxu0
  %v592 = vadd.f32 0.0, %v591
  %v593 = vpop.f32.mrb[0].mxu0
  %v594 = vpop.f32.mrb[0].mxu0
  %v595 = vadd.f32 0.0, %v594
  %v596 = vpop.f32.mrb[0].mxu0
  %597 = vmatprep.mubr.bf16.mxu0 0
  %598 = vmatmul.mubr.bf16.gmra.mrb[0].mxu0 %v535
  %v599 = vpop.f32.mrb[0].mxu0
  %v600 = vadd.f32 0.0, %v599
  %v601 = vpop.f32.mrb[0].mxu0
  %v602 = vpop.f32.mrb[0].mxu0
  %v603 = vadd.f32 0.0, %v602
  %v604 = vpop.f32.mrb[0].mxu0
  %605 = vmatprep.mubr.bf16.mxu0 0
  %606 = vmatmul.mubr.bf16.gmra.mrb[0].mxu0 %v536
  %v607 = vpop.f32.mrb[0].mxu0
  %v608 = vadd.f32 0.0, %v607
  %v609 = vpop.f32.mrb[0].mxu0
  %v610 = vpop.f32.mrb[0].mxu0
  %v611 = vadd.f32 0.0, %v610
  %v612 = vpop.f32.mrb[0].mxu0
  %613 = vmatprep.mubr.bf16.mxu0 0
  %614 = vmatmul.mubr.bf16.gmra.mrb[0].mxu0 %v537
  %v615 = vpop.f32.mrb[0].mxu0
  %v616 = vadd.f32 0.0, %v615
  %v617 = vpop.f32.mrb[0].mxu0
  %v618 = vpop.f32.mrb[0].mxu0
  %v619 = vadd.f32 0.0, %v618
  %v620 = vpop.f32.mrb[0].mxu0
  %621 = vmatprep.mubr.bf16.mxu0 0
  %622 = vmatmul.mubr.bf16.gmra.mrb[0].mxu0 %v538
  %v623 = vpop.f32.mrb[0].mxu0
  %v624 = vadd.f32 0.0, %v623
  %v625 = vpop.f32.mrb[0].mxu0
  %v626 = vpop.f32.mrb[0].mxu0
  %v627 = vadd.f32 0.0, %v626
  %v628 = vpop.f32.mrb[0].mxu0
  %629 = vmatprep.mubr.bf16.mxu0 0
  %630 = vmatmul.mubr.bf16.gmra.mrb[0].mxu0 %v539
  %v631 = vpop.f32.mrb[0].mxu0
  %v632 = vadd.f32 0.0, %v631
  %v633 = vpop.f32.mrb[0].mxu0
  %v634 = vpop.f32.mrb[0].mxu0
  %v635 = vadd.f32 0.0, %v634
  %v636 = vpop.f32.mrb[0].mxu0
  %637 = vmatprep.mubr.bf16.mxu0 0
  %638 = vmatmul.mubr.bf16.gmra.mrb[0].mxu0 %v540
  %v639 = vpop.f32.mrb[0].mxu0
  %v640 = vadd.f32 0.0, %v639
  %v641 = vpop.f32.mrb[0].mxu0
  %v642 = vpop.f32.mrb[0].mxu0
  %v643 = vadd.f32 0.0, %v642
  %v644 = vpop.f32.mrb[0].mxu0
  %645 = vdwg.mxu0
  %v646 = vpack.c.bf16 %v442, %v439
  %v647 = vpack.c.bf16 %v450, %v447
  %v648 = vpack.c.bf16 %v458, %v455
  %v649 = vpack.c.bf16 %v466, %v463
  %v650 = vpack.c.bf16 %v474, %v471
  %v651 = vpack.c.bf16 %v482, %v479
  %v652 = vpack.c.bf16 %v490, %v487
  %v653 = vpack.c.bf16 %v498, %v495
  %654 = vmatprep.subr.bf16.mxu0 0
  %655 = vmatpush1.bf16.msra.mxu0 %v646
  %656 = vmatprep.subr.bf16.mxu0 0
  %657 = vmatpush1.bf16.msra.mxu0 %v647
  %658 = vmatprep.subr.bf16.mxu0 0
  %659 = vmatpush1.bf16.msra.mxu0 %v648
  %660 = vmatprep.subr.bf16.mxu0 0
  %661 = vmatpush1.bf16.msra.mxu0 %v649
  %662 = vmatprep.subr.bf16.mxu0 0
  %663 = vmatpush1.bf16.msra.mxu0 %v650
  %664 = vmatprep.subr.bf16.mxu0 0
  %665 = vmatpush1.bf16.msra.mxu0 %v651
  %666 = vmatprep.subr.bf16.mxu0 0
  %667 = vmatpush1.bf16.msra.mxu0 %v652
  %668 = vmatprep.subr.bf16.mxu0 0
  %669 = vmatpush1.bf16.msra.mxu0 %v653
  %670 = vmatprep.subr.bf16.mxu0 0
  %671 = vmatpush1.bf16.msra.mxu0 0
  %672 = vmatprep.subr.bf16.mxu0 0
  %673 = vmatpush1.bf16.msra.mxu0 0
  %674 = vmatprep.subr.bf16.mxu0 0
  %675 = vmatpush1.bf16.msra.mxu0 0
  %676 = vmatprep.subr.bf16.mxu0 0
  %677 = vmatpush1.bf16.msra.mxu0 0
  %678 = vmatprep.subr.bf16.mxu0 0
  %679 = vmatpush1.bf16.msra.mxu0 0
  %680 = vmatprep.subr.bf16.mxu0 0
  %681 = vmatpush1.bf16.msra.mxu0 0
  %682 = vmatprep.subr.bf16.mxu0 0
  %683 = vmatpush1.bf16.msra.mxu0 0
  %684 = vmatprep.subr.bf16.mxu0 0
  %685 = vmatpush1.bf16.msra.mxu0 0
  %686 = vmatprep.mubr.bf16.mxu0 0
  %687 = vmatmul.mubr.bf16.gmra.mrb[0].mxu0 %v171
  %v688 = vpop.f32.mrb[0].mxu0
  %v689 = vadd.f32 0.0, %v688
  %v690 = vpop.f32.mrb[0].mxu0
  %v691 = vpop.f32.mrb[0].mxu0
  %v692 = vadd.f32 0.0, %v691
  %v693 = vpop.f32.mrb[0].mxu0
  %694 = vmatprep.mubr.bf16.mxu0 0
  %695 = vmatmul.mubr.bf16.gmra.mrb[0].mxu0 %v172
  %v696 = vpop.f32.mrb[0].mxu0
  %v697 = vadd.f32 0.0, %v696
  %v698 = vpop.f32.mrb[0].mxu0
  %v699 = vpop.f32.mrb[0].mxu0
  %v700 = vadd.f32 0.0, %v699
  %v701 = vpop.f32.mrb[0].mxu0
  %702 = vmatprep.mubr.bf16.mxu0 0
  %703 = vmatmul.mubr.bf16.gmra.mrb[0].mxu0 %v173
  %v704 = vpop.f32.mrb[0].mxu0
  %v705 = vadd.f32 0.0, %v704
  %v706 = vpop.f32.mrb[0].mxu0
  %v707 = vpop.f32.mrb[0].mxu0
  %v708 = vadd.f32 0.0, %v707
  %v709 = vpop.f32.mrb[0].mxu0
  %710 = vmatprep.mubr.bf16.mxu0 0
  %711 = vmatmul.mubr.bf16.gmra.mrb[0].mxu0 %v174
  %v712 = vpop.f32.mrb[0].mxu0
  %v713 = vadd.f32 0.0, %v712
  %v714 = vpop.f32.mrb[0].mxu0
  %v715 = vpop.f32.mrb[0].mxu0
  %v716 = vadd.f32 0.0, %v715
  %v717 = vpop.f32.mrb[0].mxu0
  %718 = vmatprep.mubr.bf16.mxu0 0
  %719 = vmatmul.mubr.bf16.gmra.mrb[0].mxu0 %v175
  %v720 = vpop.f32.mrb[0].mxu0
  %v721 = vadd.f32 0.0, %v720
  %v722 = vpop.f32.mrb[0].mxu0
  %v723 = vpop.f32.mrb[0].mxu0
  %v724 = vadd.f32 0.0, %v723
  %v725 = vpop.f32.mrb[0].mxu0
  %726 = vmatprep.mubr.bf16.mxu0 0
  %727 = vmatmul.mubr.bf16.gmra.mrb[0].mxu0 %v176
  %v728 = vpop.f32.mrb[0].mxu0
  %v729 = vadd.f32 0.0, %v728
  %v730 = vpop.f32.mrb[0].mxu0
  %v731 = vpop.f32.mrb[0].mxu0
  %v732 = vadd.f32 0.0, %v731
  %v733 = vpop.f32.mrb[0].mxu0
  %734 = vmatprep.mubr.bf16.mxu0 0
  %735 = vmatmul.mubr.bf16.gmra.mrb[0].mxu0 %v177
  %v736 = vpop.f32.mrb[0].mxu0
  %v737 = vadd.f32 0.0, %v736
  %v738 = vpop.f32.mrb[0].mxu0
  %v739 = vpop.f32.mrb[0].mxu0
  %v740 = vadd.f32 0.0, %v739
  %v741 = vpop.f32.mrb[0].mxu0
  %742 = vmatprep.mubr.bf16.mxu0 0
  %743 = vmatmul.mubr.bf16.gmra.mrb[0].mxu0 %v178
  %v744 = vpop.f32.mrb[0].mxu0
  %v745 = vadd.f32 0.0, %v744
  %v746 = vpop.f32.mrb[0].mxu0
  %v747 = vpop.f32.mrb[0].mxu0
  %v748 = vadd.f32 0.0, %v747
  %v749 = vpop.f32.mrb[0].mxu0
  %750 = vdwg.mxu0
  %751 = vst [vmem:[%s6] sm:$0xff] %v689
  %752 = vst [vmem:[%s6 + $0x8] sm:$0xff] %v692
  %753 = vst [vmem:[%s6 + $0x10] sm:$0xff] %v697
  %754 = vst [vmem:[%s6 + $0x18] sm:$0xff] %v700
  %755 = vst [vmem:[%s6 + $0x20] sm:$0xff] %v705
  %756 = vst [vmem:[%s6 + $0x28] sm:$0xff] %v708
  %757 = vst [vmem:[%s6 + $0x30] sm:$0xff] %v713
  %758 = vst [vmem:[%s6 + $0x38] sm:$0xff] %v716
  %759 = vst [vmem:[%s6 + $0x40] sm:$0xff] %v721
  %760 = vst [vmem:[%s6 + $0x48] sm:$0xff] %v724
  %761 = vst [vmem:[%s6 + $0x50] sm:$0xff] %v729
  %762 = vst [vmem:[%s6 + $0x58] sm:$0xff] %v732
  %763 = vst [vmem:[%s6 + $0x60] sm:$0xff] %v737
  %764 = vst [vmem:[%s6 + $0x68] sm:$0xff] %v740
  %765 = vst [vmem:[%s6 + $0x70] sm:$0xff] %v745
  %766 = vst [vmem:[%s6 + $0x78] sm:$0xff] %v748
  %767 = vst [vmem:[%s7] sm:$0xff] %v584
  %768 = vst [vmem:[%s7 + $0x8] sm:$0xff] %v587
  %769 = vst [vmem:[%s7 + $0x10] sm:$0xff] %v592
  %770 = vst [vmem:[%s7 + $0x18] sm:$0xff] %v595
  %771 = vst [vmem:[%s7 + $0x20] sm:$0xff] %v600
  %772 = vst [vmem:[%s7 + $0x28] sm:$0xff] %v603
  %773 = vst [vmem:[%s7 + $0x30] sm:$0xff] %v608
  %774 = vst [vmem:[%s7 + $0x38] sm:$0xff] %v611
  %775 = vst [vmem:[%s7 + $0x40] sm:$0xff] %v616
  %776 = vst [vmem:[%s7 + $0x48] sm:$0xff] %v619
  %777 = vst [vmem:[%s7 + $0x50] sm:$0xff] %v624
  %778 = vst [vmem:[%s7 + $0x58] sm:$0xff] %v627
  %779 = vst [vmem:[%s7 + $0x60] sm:$0xff] %v632
  %780 = vst [vmem:[%s7 + $0x68] sm:$0xff] %v635
  %781 = vst [vmem:[%s7 + $0x70] sm:$0xff] %v640
  %782 = vst [vmem:[%s7 + $0x78] sm:$0xff] %v643
  %v783 = vmul.f32 %v689, 0.7
  %v784 = vmul.f32 %v692, 0.7
  %v785 = vmul.f32 %v697, 0.7
  %v786 = vmul.f32 %v700, 0.7
  %v787 = vmul.f32 %v705, 0.7
  %v788 = vmul.f32 %v708, 0.7
  %v789 = vmul.f32 %v713, 0.7
  %v790 = vmul.f32 %v716, 0.7
  %v791 = vmul.f32 %v721, 0.7
  %v792 = vmul.f32 %v724, 0.7
  %v793 = vmul.f32 %v729, 0.7
  %v794 = vmul.f32 %v732, 0.7
  %v795 = vmul.f32 %v737, 0.7
  %v796 = vmul.f32 %v740, 0.7
  %v797 = vmul.f32 %v745, 0.7
  %v798 = vmul.f32 %v748, 0.7
  %v799 = vmul.f32 %v584, 0.3
  %v800 = vmul.f32 %v587, 0.3
  %v801 = vmul.f32 %v592, 0.3
  %v802 = vmul.f32 %v595, 0.3
  %v803 = vmul.f32 %v600, 0.3
  %v804 = vmul.f32 %v603, 0.3
  %v805 = vmul.f32 %v608, 0.3
  %v806 = vmul.f32 %v611, 0.3
  %v807 = vmul.f32 %v616, 0.3
  %v808 = vmul.f32 %v619, 0.3
  %v809 = vmul.f32 %v624, 0.3
  %v810 = vmul.f32 %v627, 0.3
  %v811 = vmul.f32 %v632, 0.3
  %v812 = vmul.f32 %v635, 0.3
  %v813 = vmul.f32 %v640, 0.3
  %v814 = vmul.f32 %v643, 0.3
  %v815 = vadd.f32 %v783, %v799
  %v816 = vadd.f32 %v784, %v800
  %v817 = vadd.f32 %v785, %v801
  %v818 = vadd.f32 %v786, %v802
  %v819 = vadd.f32 %v787, %v803
  %v820 = vadd.f32 %v788, %v804
  %v821 = vadd.f32 %v789, %v805
  %v822 = vadd.f32 %v790, %v806
  %v823 = vadd.f32 %v791, %v807
  %v824 = vadd.f32 %v792, %v808
  %v825 = vadd.f32 %v793, %v809
  %v826 = vadd.f32 %v794, %v810
  %v827 = vadd.f32 %v795, %v811
  %v828 = vadd.f32 %v796, %v812
  %v829 = vadd.f32 %v797, %v813
  %v830 = vadd.f32 %v798, %v814
  %v831 = vmax.f32 %v815, 0.0
  %v832 = vmax.f32 %v816, 0.0
  %v833 = vmax.f32 %v817, 0.0
  %v834 = vmax.f32 %v818, 0.0
  %v835 = vmax.f32 %v819, 0.0
  %v836 = vmax.f32 %v820, 0.0
  %v837 = vmax.f32 %v821, 0.0
  %v838 = vmax.f32 %v822, 0.0
  %v839 = vmax.f32 %v823, 0.0
  %v840 = vmax.f32 %v824, 0.0
  %v841 = vmax.f32 %v825, 0.0
  %v842 = vmax.f32 %v826, 0.0
  %v843 = vmax.f32 %v827, 0.0
  %v844 = vmax.f32 %v828, 0.0
  %v845 = vmax.f32 %v829, 0.0
  %v846 = vmax.f32 %v830, 0.0
  %v847 = vld [vmem:[%s4] sm:$0xf]
  %v848 = vld [vmem:[%s4 + $0x4] sm:$0xf]
  %v849 = vld [vmem:[%s4 + $0x8] sm:$0xf]
  %v850 = vld [vmem:[%s4 + $0xc] sm:$0xf]
  %v851 = vld [vmem:[%s4 + $0x10] sm:$0xf]
  %v852 = vld [vmem:[%s4 + $0x14] sm:$0xf]
  %v853 = vld [vmem:[%s4 + $0x18] sm:$0xf]
  %v854 = vld [vmem:[%s4 + $0x1c] sm:$0xf]
  %v855 = vld [vmem:[%s4 + $0x20] sm:$0xf]
  %v856 = vld [vmem:[%s4 + $0x24] sm:$0xf]
  %v857 = vld [vmem:[%s4 + $0x28] sm:$0xf]
  %v858 = vld [vmem:[%s4 + $0x2c] sm:$0xf]
  %v859 = vld [vmem:[%s4 + $0x30] sm:$0xf]
  %v860 = vld [vmem:[%s4 + $0x34] sm:$0xf]
  %v861 = vld [vmem:[%s4 + $0x38] sm:$0xf]
  %v862 = vld [vmem:[%s4 + $0x3c] sm:$0xf]
  %v863 = vpack.c.bf16 %v832, %v831
  %v864 = vpack.c.bf16 %v834, %v833
  %v865 = vpack.c.bf16 %v836, %v835
  %v866 = vpack.c.bf16 %v838, %v837
  %v867 = vpack.c.bf16 %v840, %v839
  %v868 = vpack.c.bf16 %v842, %v841
  %v869 = vpack.c.bf16 %v844, %v843
  %v870 = vpack.c.bf16 %v846, %v845
  %v887 = vunpack.c.l.b16 %v847
  %v888 = vunpack.c.l.b16 %v848
  %v889 = vunpack.c.l.b16 %v849
  %v890 = vunpack.c.l.b16 %v850
  %v891 = vunpack.c.l.b16 %v851
  %v892 = vunpack.c.l.b16 %v852
  %v893 = vunpack.c.l.b16 %v853
  %v894 = vunpack.c.l.b16 %v854
  %v895 = vunpack.c.l.b16 %v855
  %v896 = vunpack.c.l.b16 %v856
  %v897 = vunpack.c.l.b16 %v857
  %v898 = vunpack.c.l.b16 %v858
  %v899 = vunpack.c.l.b16 %v859
  %v900 = vunpack.c.l.b16 %v860
  %v901 = vunpack.c.l.b16 %v861
  %v902 = vunpack.c.l.b16 %v862
  %v903 = vpack.c.b16 %v888, %v887
  %v904 = vpack.c.b16 %v890, %v889
  %v905 = vpack.c.b16 %v892, %v891
  %v906 = vpack.c.b16 %v894, %v893
  %v907 = vpack.c.b16 %v896, %v895
  %v908 = vpack.c.b16 %v898, %v897
  %v909 = vpack.c.b16 %v900, %v899
  %v910 = vpack.c.b16 %v902, %v901
  %919 = vmatprep.subr.bf16.mxu0 0
  %920 = vmatpush1.bf16.msra.mxu0 %v903
  %921 = vmatprep.subr.bf16.mxu0 0
  %922 = vmatpush1.bf16.msra.mxu0 %v904
  %923 = vmatprep.subr.bf16.mxu0 0
  %924 = vmatpush1.bf16.msra.mxu0 %v905
  %925 = vmatprep.subr.bf16.mxu0 0
  %926 = vmatpush1.bf16.msra.mxu0 %v906
  %927 = vmatprep.subr.bf16.mxu0 0
  %928 = vmatpush1.bf16.msra.mxu0 %v907
  %929 = vmatprep.subr.bf16.mxu0 0
  %930 = vmatpush1.bf16.msra.mxu0 %v908
  %931 = vmatprep.subr.bf16.mxu0 0
  %932 = vmatpush1.bf16.msra.mxu0 %v909
  %933 = vmatprep.subr.bf16.mxu0 0
  %934 = vmatpush1.bf16.msra.mxu0 %v910
  %935 = vmatprep.subr.bf16.mxu0 0
  %936 = vmatpush1.bf16.msra.mxu0 0
  %937 = vmatprep.subr.bf16.mxu0 0
  %938 = vmatpush1.bf16.msra.mxu0 0
  %939 = vmatprep.subr.bf16.mxu0 0
  %940 = vmatpush1.bf16.msra.mxu0 0
  %941 = vmatprep.subr.bf16.mxu0 0
  %942 = vmatpush1.bf16.msra.mxu0 0
  %943 = vmatprep.subr.bf16.mxu0 0
  %944 = vmatpush1.bf16.msra.mxu0 0
  %945 = vmatprep.subr.bf16.mxu0 0
  %946 = vmatpush1.bf16.msra.mxu0 0
  %947 = vmatprep.subr.bf16.mxu0 0
  %948 = vmatpush1.bf16.msra.mxu0 0
  %949 = vmatprep.subr.bf16.mxu0 0
  %950 = vmatpush1.bf16.msra.mxu0 0
  %951 = vmatprep.mubr.bf16.mxu0 0
  %952 = vmatmul.mubr.bf16.gmra.mrb[0].mxu0 %v863
  %v953 = vpop.f32.mrb[0].mxu0
  %v954 = vadd.f32 0.0, %v953
  %v955 = vpop.f32.mrb[0].mxu0
  %v956 = vpop.f32.mrb[0].mxu0
  %v957 = vadd.f32 0.0, %v956
  %v958 = vpop.f32.mrb[0].mxu0
  %959 = vmatprep.mubr.bf16.mxu0 0
  %960 = vmatmul.mubr.bf16.gmra.mrb[0].mxu0 %v864
  %v961 = vpop.f32.mrb[0].mxu0
  %v962 = vadd.f32 0.0, %v961
  %v963 = vpop.f32.mrb[0].mxu0
  %v964 = vpop.f32.mrb[0].mxu0
  %v965 = vadd.f32 0.0, %v964
  %v966 = vpop.f32.mrb[0].mxu0
  %967 = vmatprep.mubr.bf16.mxu0 0
  %968 = vmatmul.mubr.bf16.gmra.mrb[0].mxu0 %v865
  %v969 = vpop.f32.mrb[0].mxu0
  %v970 = vadd.f32 0.0, %v969
  %v971 = vpop.f32.mrb[0].mxu0
  %v972 = vpop.f32.mrb[0].mxu0
  %v973 = vadd.f32 0.0, %v972
  %v974 = vpop.f32.mrb[0].mxu0
  %975 = vmatprep.mubr.bf16.mxu0 0
  %976 = vmatmul.mubr.bf16.gmra.mrb[0].mxu0 %v866
  %v977 = vpop.f32.mrb[0].mxu0
  %v978 = vadd.f32 0.0, %v977
  %v979 = vpop.f32.mrb[0].mxu0
  %v980 = vpop.f32.mrb[0].mxu0
  %v981 = vadd.f32 0.0, %v980
  %v982 = vpop.f32.mrb[0].mxu0
  %983 = vmatprep.mubr.bf16.mxu0 0
  %984 = vmatmul.mubr.bf16.gmra.mrb[0].mxu0 %v867
  %v985 = vpop.f32.mrb[0].mxu0
  %v986 = vadd.f32 0.0, %v985
  %v987 = vpop.f32.mrb[0].mxu0
  %v988 = vpop.f32.mrb[0].mxu0
  %v989 = vadd.f32 0.0, %v988
  %v990 = vpop.f32.mrb[0].mxu0
  %991 = vmatprep.mubr.bf16.mxu0 0
  %992 = vmatmul.mubr.bf16.gmra.mrb[0].mxu0 %v868
  %v993 = vpop.f32.mrb[0].mxu0
  %v994 = vadd.f32 0.0, %v993
  %v995 = vpop.f32.mrb[0].mxu0
  %v996 = vpop.f32.mrb[0].mxu0
  %v997 = vadd.f32 0.0, %v996
  %v998 = vpop.f32.mrb[0].mxu0
  %999 = vmatprep.mubr.bf16.mxu0 0
  %1000 = vmatmul.mubr.bf16.gmra.mrb[0].mxu0 %v869
  %v1001 = vpop.f32.mrb[0].mxu0
  %v1002 = vadd.f32 0.0, %v1001
  %v1003 = vpop.f32.mrb[0].mxu0
  %v1004 = vpop.f32.mrb[0].mxu0
  %v1005 = vadd.f32 0.0, %v1004
  %v1006 = vpop.f32.mrb[0].mxu0
  %1007 = vmatprep.mubr.bf16.mxu0 0
  %1008 = vmatmul.mubr.bf16.gmra.mrb[0].mxu0 %v870
  %v1009 = vpop.f32.mrb[0].mxu0
  %v1010 = vadd.f32 0.0, %v1009
  %v1011 = vpop.f32.mrb[0].mxu0
  %v1012 = vpop.f32.mrb[0].mxu0
  %v1013 = vadd.f32 0.0, %v1012
  %v1014 = vpop.f32.mrb[0].mxu0
  %1015 = vdwg.mxu0
  %v1016 = vpack.c.bf16 %v957, %v954
  %v1017 = vpack.c.bf16 %v965, %v962
  %v1018 = vpack.c.bf16 %v973, %v970
  %v1019 = vpack.c.bf16 %v981, %v978
  %v1020 = vpack.c.bf16 %v989, %v986
  %v1021 = vpack.c.bf16 %v997, %v994
  %v1022 = vpack.c.bf16 %v1005, %v1002
  %v1023 = vpack.c.bf16 %v1013, %v1010
  %1024 = vmatprep.subr.bf16.mxu0 0
  %1025 = vmatpush1.bf16.msra.mxu0 %v1016
  %1026 = vmatprep.subr.bf16.mxu0 0
  %1027 = vmatpush1.bf16.msra.mxu0 %v1017
  %1028 = vmatprep.subr.bf16.mxu0 0
  %1029 = vmatpush1.bf16.msra.mxu0 %v1018
  %1030 = vmatprep.subr.bf16.mxu0 0
  %1031 = vmatpush1.bf16.msra.mxu0 %v1019
  %1032 = vmatprep.subr.bf16.mxu0 0
  %1033 = vmatpush1.bf16.msra.mxu0 %v1020
  %1034 = vmatprep.subr.bf16.mxu0 0
  %1035 = vmatpush1.bf16.msra.mxu0 %v1021
  %1036 = vmatprep.subr.bf16.mxu0 0
  %1037 = vmatpush1.bf16.msra.mxu0 %v1022
  %1038 = vmatprep.subr.bf16.mxu0 0
  %1039 = vmatpush1.bf16.msra.mxu0 %v1023
  %1040 = vmatprep.subr.bf16.mxu0 0
  %1041 = vmatpush1.bf16.msra.mxu0 0
  %1042 = vmatprep.subr.bf16.mxu0 0
  %1043 = vmatpush1.bf16.msra.mxu0 0
  %1044 = vmatprep.subr.bf16.mxu0 0
  %1045 = vmatpush1.bf16.msra.mxu0 0
  %1046 = vmatprep.subr.bf16.mxu0 0
  %1047 = vmatpush1.bf16.msra.mxu0 0
  %1048 = vmatprep.subr.bf16.mxu0 0
  %1049 = vmatpush1.bf16.msra.mxu0 0
  %1050 = vmatprep.subr.bf16.mxu0 0
  %1051 = vmatpush1.bf16.msra.mxu0 0
  %1052 = vmatprep.subr.bf16.mxu0 0
  %1053 = vmatpush1.bf16.msra.mxu0 0
  %1054 = vmatprep.subr.bf16.mxu0 0
  %1055 = vmatpush1.bf16.msra.mxu0 0
  %1056 = vmatprep.mubr.bf16.mxu0 0
  %1057 = vmatmul.mubr.bf16.gmra.mrb[0].mxu0 %v396
  %v1058 = vpop.f32.mrb[0].mxu0
  %v1059 = vadd.f32 0.0, %v1058
  %v1060 = vpop.f32.mrb[0].mxu0
  %v1061 = vpop.f32.mrb[0].mxu0
  %v1062 = vadd.f32 0.0, %v1061
  %v1063 = vpop.f32.mrb[0].mxu0
  %1064 = vmatprep.mubr.bf16.mxu0 0
  %1065 = vmatmul.mubr.bf16.gmra.mrb[0].mxu0 %v397
  %v1066 = vpop.f32.mrb[0].mxu0
  %v1067 = vadd.f32 0.0, %v1066
  %v1068 = vpop.f32.mrb[0].mxu0
  %v1069 = vpop.f32.mrb[0].mxu0
  %v1070 = vadd.f32 0.0, %v1069
  %v1071 = vpop.f32.mrb[0].mxu0
  %1072 = vmatprep.mubr.bf16.mxu0 0
  %1073 = vmatmul.mubr.bf16.gmra.mrb[0].mxu0 %v398
  %v1074 = vpop.f32.mrb[0].mxu0
  %v1075 = vadd.f32 0.0, %v1074
  %v1076 = vpop.f32.mrb[0].mxu0
  %v1077 = vpop.f32.mrb[0].mxu0
  %v1078 = vadd.f32 0.0, %v1077
  %v1079 = vpop.f32.mrb[0].mxu0
  %1080 = vmatprep.mubr.bf16.mxu0 0
  %1081 = vmatmul.mubr.bf16.gmra.mrb[0].mxu0 %v399
  %v1082 = vpop.f32.mrb[0].mxu0
  %v1083 = vadd.f32 0.0, %v1082
  %v1084 = vpop.f32.mrb[0].mxu0
  %v1085 = vpop.f32.mrb[0].mxu0
  %v1086 = vadd.f32 0.0, %v1085
  %v1087 = vpop.f32.mrb[0].mxu0
  %1088 = vmatprep.mubr.bf16.mxu0 0
  %1089 = vmatmul.mubr.bf16.gmra.mrb[0].mxu0 %v400
  %v1090 = vpop.f32.mrb[0].mxu0
  %v1091 = vadd.f32 0.0, %v1090
  %v1092 = vpop.f32.mrb[0].mxu0
  %v1093 = vpop.f32.mrb[0].mxu0
  %v1094 = vadd.f32 0.0, %v1093
  %v1095 = vpop.f32.mrb[0].mxu0
  %1096 = vmatprep.mubr.bf16.mxu0 0
  %1097 = vmatmul.mubr.bf16.gmra.mrb[0].mxu0 %v401
  %v1098 = vpop.f32.mrb[0].mxu0
  %v1099 = vadd.f32 0.0, %v1098
  %v1100 = vpop.f32.mrb[0].mxu0
  %v1101 = vpop.f32.mrb[0].mxu0
  %v1102 = vadd.f32 0.0, %v1101
  %v1103 = vpop.f32.mrb[0].mxu0
  %1104 = vmatprep.mubr.bf16.mxu0 0
  %1105 = vmatmul.mubr.bf16.gmra.mrb[0].mxu0 %v402
  %v1106 = vpop.f32.mrb[0].mxu0
  %v1107 = vadd.f32 0.0, %v1106
  %v1108 = vpop.f32.mrb[0].mxu0
  %v1109 = vpop.f32.mrb[0].mxu0
  %v1110 = vadd.f32 0.0, %v1109
  %v1111 = vpop.f32.mrb[0].mxu0
  %1112 = vmatprep.mubr.bf16.mxu0 0
  %1113 = vmatmul.mubr.bf16.gmra.mrb[0].mxu0 %v403
  %v1114 = vpop.f32.mrb[0].mxu0
  %v1115 = vadd.f32 0.0, %v1114
  %v1116 = vpop.f32.mrb[0].mxu0
  %v1117 = vpop.f32.mrb[0].mxu0
  %v1118 = vadd.f32 0.0, %v1117
  %v1119 = vpop.f32.mrb[0].mxu0
  %1120 = vdwg.mxu0
  %1121 = vmatprep.subr.bf16.mxu0 0
  %1122 = vmatpush1.bf16.msra.mxu0 %v1016
  %1123 = vmatprep.subr.bf16.mxu0 0
  %1124 = vmatpush1.bf16.msra.mxu0 %v1017
  %1125 = vmatprep.subr.bf16.mxu0 0
  %1126 = vmatpush1.bf16.msra.mxu0 %v1018
  %1127 = vmatprep.subr.bf16.mxu0 0
  %1128 = vmatpush1.bf16.msra.mxu0 %v1019
  %1129 = vmatprep.subr.bf16.mxu0 0
  %1130 = vmatpush1.bf16.msra.mxu0 %v1020
  %1131 = vmatprep.subr.bf16.mxu0 0
  %1132 = vmatpush1.bf16.msra.mxu0 %v1021
  %1133 = vmatprep.subr.bf16.mxu0 0
  %1134 = vmatpush1.bf16.msra.mxu0 %v1022
  %1135 = vmatprep.subr.bf16.mxu0 0
  %1136 = vmatpush1.bf16.msra.mxu0 %v1023
  %1137 = vmatprep.subr.bf16.mxu0 0
  %1138 = vmatpush1.bf16.msra.mxu0 0
  %1139 = vmatprep.subr.bf16.mxu0 0
  %1140 = vmatpush1.bf16.msra.mxu0 0
  %1141 = vmatprep.subr.bf16.mxu0 0
  %1142 = vmatpush1.bf16.msra.mxu0 0
  %1143 = vmatprep.subr.bf16.mxu0 0
  %1144 = vmatpush1.bf16.msra.mxu0 0
  %1145 = vmatprep.subr.bf16.mxu0 0
  %1146 = vmatpush1.bf16.msra.mxu0 0
  %1147 = vmatprep.subr.bf16.mxu0 0
  %1148 = vmatpush1.bf16.msra.mxu0 0
  %1149 = vmatprep.subr.bf16.mxu0 0
  %1150 = vmatpush1.bf16.msra.mxu0 0
  %1151 = vmatprep.subr.bf16.mxu0 0
  %1152 = vmatpush1.bf16.msra.mxu0 0
  %1153 = vmatprep.mubr.bf16.mxu0 0
  %1154 = vmatmul.mubr.bf16.gmra.mrb[0].mxu0 %v533
  %v1155 = vpop.f32.mrb[0].mxu0
  %v1156 = vadd.f32 0.0, %v1155
  %v1157 = vpop.f32.mrb[0].mxu0
  %v1158 = vpop.f32.mrb[0].mxu0
  %v1159 = vadd.f32 0.0, %v1158
  %v1160 = vpop.f32.mrb[0].mxu0
  %1161 = vmatprep.mubr.bf16.mxu0 0
  %1162 = vmatmul.mubr.bf16.gmra.mrb[0].mxu0 %v534
  %v1163 = vpop.f32.mrb[0].mxu0
  %v1164 = vadd.f32 0.0, %v1163
  %v1165 = vpop.f32.mrb[0].mxu0
  %v1166 = vpop.f32.mrb[0].mxu0
  %v1167 = vadd.f32 0.0, %v1166
  %v1168 = vpop.f32.mrb[0].mxu0
  %1169 = vmatprep.mubr.bf16.mxu0 0
  %1170 = vmatmul.mubr.bf16.gmra.mrb[0].mxu0 %v535
  %v1171 = vpop.f32.mrb[0].mxu0
  %v1172 = vadd.f32 0.0, %v1171
  %v1173 = vpop.f32.mrb[0].mxu0
  %v1174 = vpop.f32.mrb[0].mxu0
  %v1175 = vadd.f32 0.0, %v1174
  %v1176 = vpop.f32.mrb[0].mxu0
  %1177 = vmatprep.mubr.bf16.mxu0 0
  %1178 = vmatmul.mubr.bf16.gmra.mrb[0].mxu0 %v536
  %v1179 = vpop.f32.mrb[0].mxu0
  %v1180 = vadd.f32 0.0, %v1179
  %v1181 = vpop.f32.mrb[0].mxu0
  %v1182 = vpop.f32.mrb[0].mxu0
  %v1183 = vadd.f32 0.0, %v1182
  %v1184 = vpop.f32.mrb[0].mxu0
  %1185 = vmatprep.mubr.bf16.mxu0 0
  %1186 = vmatmul.mubr.bf16.gmra.mrb[0].mxu0 %v537
  %v1187 = vpop.f32.mrb[0].mxu0
  %v1188 = vadd.f32 0.0, %v1187
  %v1189 = vpop.f32.mrb[0].mxu0
  %v1190 = vpop.f32.mrb[0].mxu0
  %v1191 = vadd.f32 0.0, %v1190
  %v1192 = vpop.f32.mrb[0].mxu0
  %1193 = vmatprep.mubr.bf16.mxu0 0
  %1194 = vmatmul.mubr.bf16.gmra.mrb[0].mxu0 %v538
  %v1195 = vpop.f32.mrb[0].mxu0
  %v1196 = vadd.f32 0.0, %v1195
  %v1197 = vpop.f32.mrb[0].mxu0
  %v1198 = vpop.f32.mrb[0].mxu0
  %v1199 = vadd.f32 0.0, %v1198
  %v1200 = vpop.f32.mrb[0].mxu0
  %1201 = vmatprep.mubr.bf16.mxu0 0
  %1202 = vmatmul.mubr.bf16.gmra.mrb[0].mxu0 %v539
  %v1203 = vpop.f32.mrb[0].mxu0
  %v1204 = vadd.f32 0.0, %v1203
  %v1205 = vpop.f32.mrb[0].mxu0
  %v1206 = vpop.f32.mrb[0].mxu0
  %v1207 = vadd.f32 0.0, %v1206
  %v1208 = vpop.f32.mrb[0].mxu0
  %1209 = vmatprep.mubr.bf16.mxu0 0
  %1210 = vmatmul.mubr.bf16.gmra.mrb[0].mxu0 %v540
  %v1211 = vpop.f32.mrb[0].mxu0
  %v1212 = vadd.f32 0.0, %v1211
  %v1213 = vpop.f32.mrb[0].mxu0
  %v1214 = vpop.f32.mrb[0].mxu0
  %v1215 = vadd.f32 0.0, %v1214
  %v1216 = vpop.f32.mrb[0].mxu0
  %1217 = vdwg.mxu0
  %v1218 = vmul.f32 %v1059, 0.7
  %v1219 = vmul.f32 %v1062, 0.7
  %v1220 = vmul.f32 %v1067, 0.7
  %v1221 = vmul.f32 %v1070, 0.7
  %v1222 = vmul.f32 %v1075, 0.7
  %v1223 = vmul.f32 %v1078, 0.7
  %v1224 = vmul.f32 %v1083, 0.7
  %v1225 = vmul.f32 %v1086, 0.7
  %v1226 = vmul.f32 %v1091, 0.7
  %v1227 = vmul.f32 %v1094, 0.7
  %v1228 = vmul.f32 %v1099, 0.7
  %v1229 = vmul.f32 %v1102, 0.7
  %v1230 = vmul.f32 %v1107, 0.7
  %v1231 = vmul.f32 %v1110, 0.7
  %v1232 = vmul.f32 %v1115, 0.7
  %v1233 = vmul.f32 %v1118, 0.7
  %v1234 = vpack.c.bf16 %v1219, %v1218
  %v1235 = vpack.c.bf16 %v1221, %v1220
  %v1236 = vpack.c.bf16 %v1223, %v1222
  %v1237 = vpack.c.bf16 %v1225, %v1224
  %v1238 = vpack.c.bf16 %v1227, %v1226
  %v1239 = vpack.c.bf16 %v1229, %v1228
  %v1240 = vpack.c.bf16 %v1231, %v1230
  %v1241 = vpack.c.bf16 %v1233, %v1232
  %v1242 = vmul.f32 %v1156, 0.3
  %v1243 = vmul.f32 %v1159, 0.3
  %v1244 = vmul.f32 %v1164, 0.3
  %v1245 = vmul.f32 %v1167, 0.3
  %v1246 = vmul.f32 %v1172, 0.3
  %v1247 = vmul.f32 %v1175, 0.3
  %v1248 = vmul.f32 %v1180, 0.3
  %v1249 = vmul.f32 %v1183, 0.3
  %v1250 = vmul.f32 %v1188, 0.3
  %v1251 = vmul.f32 %v1191, 0.3
  %v1252 = vmul.f32 %v1196, 0.3
  %v1253 = vmul.f32 %v1199, 0.3
  %v1254 = vmul.f32 %v1204, 0.3
  %v1255 = vmul.f32 %v1207, 0.3
  %v1256 = vmul.f32 %v1212, 0.3
  %v1257 = vmul.f32 %v1215, 0.3
  %1258 = vmatprep.subr.bf16.mxu0 0
  %1259 = vmatpush1.bf16.msra.mxu0 %v1234
  %1260 = vmatprep.subr.bf16.mxu0 0
  %1261 = vmatpush1.bf16.msra.mxu0 %v1235
  %1262 = vmatprep.subr.bf16.mxu0 0
  %1263 = vmatpush1.bf16.msra.mxu0 %v1236
  %1264 = vmatprep.subr.bf16.mxu0 0
  %1265 = vmatpush1.bf16.msra.mxu0 %v1237
  %1266 = vmatprep.subr.bf16.mxu0 0
  %1267 = vmatpush1.bf16.msra.mxu0 %v1238
  %1268 = vmatprep.subr.bf16.mxu0 0
  %1269 = vmatpush1.bf16.msra.mxu0 %v1239
  %1270 = vmatprep.subr.bf16.mxu0 0
  %1271 = vmatpush1.bf16.msra.mxu0 %v1240
  %1272 = vmatprep.subr.bf16.mxu0 0
  %1273 = vmatpush1.bf16.msra.mxu0 %v1241
  %1274 = vmatprep.subr.bf16.mxu0 0
  %1275 = vmatpush1.bf16.msra.mxu0 0
  %1276 = vmatprep.subr.bf16.mxu0 0
  %1277 = vmatpush1.bf16.msra.mxu0 0
  %1278 = vmatprep.subr.bf16.mxu0 0
  %1279 = vmatpush1.bf16.msra.mxu0 0
  %1280 = vmatprep.subr.bf16.mxu0 0
  %1281 = vmatpush1.bf16.msra.mxu0 0
  %1282 = vmatprep.subr.bf16.mxu0 0
  %1283 = vmatpush1.bf16.msra.mxu0 0
  %1284 = vmatprep.subr.bf16.mxu0 0
  %1285 = vmatpush1.bf16.msra.mxu0 0
  %1286 = vmatprep.subr.bf16.mxu0 0
  %1287 = vmatpush1.bf16.msra.mxu0 0
  %1288 = vmatprep.subr.bf16.mxu0 0
  %1289 = vmatpush1.bf16.msra.mxu0 0
  %1290 = vmatprep.mubr.bf16.mxu0 0
  %1291 = vmatmul.mubr.bf16.gmra.mrb[0].mxu0 %v171
  %v1292 = vpop.f32.mrb[0].mxu0
  %v1293 = vadd.f32 %v1242, %v1292
  %v1294 = vpop.f32.mrb[0].mxu0
  %v1295 = vpop.f32.mrb[0].mxu0
  %v1296 = vadd.f32 %v1243, %v1295
  %v1297 = vpop.f32.mrb[0].mxu0
  %1298 = vmatprep.mubr.bf16.mxu0 0
  %1299 = vmatmul.mubr.bf16.gmra.mrb[0].mxu0 %v172
  %v1300 = vpop.f32.mrb[0].mxu0
  %v1301 = vadd.f32 %v1244, %v1300
  %v1302 = vpop.f32.mrb[0].mxu0
  %v1303 = vpop.f32.mrb[0].mxu0
  %v1304 = vadd.f32 %v1245, %v1303
  %v1305 = vpop.f32.mrb[0].mxu0
  %1306 = vmatprep.mubr.bf16.mxu0 0
  %1307 = vmatmul.mubr.bf16.gmra.mrb[0].mxu0 %v173
  %v1308 = vpop.f32.mrb[0].mxu0
  %v1309 = vadd.f32 %v1246, %v1308
  %v1310 = vpop.f32.mrb[0].mxu0
  %v1311 = vpop.f32.mrb[0].mxu0
  %v1312 = vadd.f32 %v1247, %v1311
  %v1313 = vpop.f32.mrb[0].mxu0
  %1314 = vmatprep.mubr.bf16.mxu0 0
  %1315 = vmatmul.mubr.bf16.gmra.mrb[0].mxu0 %v174
  %v1316 = vpop.f32.mrb[0].mxu0
  %v1317 = vadd.f32 %v1248, %v1316
  %v1318 = vpop.f32.mrb[0].mxu0
  %v1319 = vpop.f32.mrb[0].mxu0
  %v1320 = vadd.f32 %v1249, %v1319
  %v1321 = vpop.f32.mrb[0].mxu0
  %1322 = vmatprep.mubr.bf16.mxu0 0
  %1323 = vmatmul.mubr.bf16.gmra.mrb[0].mxu0 %v175
  %v1324 = vpop.f32.mrb[0].mxu0
  %v1325 = vadd.f32 %v1250, %v1324
  %v1326 = vpop.f32.mrb[0].mxu0
  %v1327 = vpop.f32.mrb[0].mxu0
  %v1328 = vadd.f32 %v1251, %v1327
  %v1329 = vpop.f32.mrb[0].mxu0
  %1330 = vmatprep.mubr.bf16.mxu0 0
  %1331 = vmatmul.mubr.bf16.gmra.mrb[0].mxu0 %v176
  %v1332 = vpop.f32.mrb[0].mxu0
  %v1333 = vadd.f32 %v1252, %v1332
  %v1334 = vpop.f32.mrb[0].mxu0
  %v1335 = vpop.f32.mrb[0].mxu0
  %v1336 = vadd.f32 %v1253, %v1335
  %v1337 = vpop.f32.mrb[0].mxu0
  %1338 = vmatprep.mubr.bf16.mxu0 0
  %1339 = vmatmul.mubr.bf16.gmra.mrb[0].mxu0 %v177
  %v1340 = vpop.f32.mrb[0].mxu0
  %v1341 = vadd.f32 %v1254, %v1340
  %v1342 = vpop.f32.mrb[0].mxu0
  %v1343 = vpop.f32.mrb[0].mxu0
  %v1344 = vadd.f32 %v1255, %v1343
  %v1345 = vpop.f32.mrb[0].mxu0
  %1346 = vmatprep.mubr.bf16.mxu0 0
  %1347 = vmatmul.mubr.bf16.gmra.mrb[0].mxu0 %v178
  %v1348 = vpop.f32.mrb[0].mxu0
  %v1349 = vadd.f32 %v1256, %v1348
  %v1350 = vpop.f32.mrb[0].mxu0
  %v1351 = vpop.f32.mrb[0].mxu0
  %v1352 = vadd.f32 %v1257, %v1351
  %v1353 = vpop.f32.mrb[0].mxu0
  %1354 = vdwg.mxu0
  %v1355 = vmax.f32 %v1293, 0.0
  %v1356 = vmax.f32 %v1296, 0.0
  %v1357 = vmax.f32 %v1301, 0.0
  %v1358 = vmax.f32 %v1304, 0.0
  %v1359 = vmax.f32 %v1309, 0.0
  %v1360 = vmax.f32 %v1312, 0.0
  %v1361 = vmax.f32 %v1317, 0.0
  %v1362 = vmax.f32 %v1320, 0.0
  %v1363 = vmax.f32 %v1325, 0.0
  %v1364 = vmax.f32 %v1328, 0.0
  %v1365 = vmax.f32 %v1333, 0.0
  %v1366 = vmax.f32 %v1336, 0.0
  %v1367 = vmax.f32 %v1341, 0.0
  %v1368 = vmax.f32 %v1344, 0.0
  %v1369 = vmax.f32 %v1349, 0.0
  %v1370 = vmax.f32 %v1352, 0.0
  %1371 = vst [vmem:[%s8] sm:$0xff] %v1355
  %1372 = vst [vmem:[%s8 + $0x8] sm:$0xff] %v1356
  %1373 = vst [vmem:[%s8 + $0x10] sm:$0xff] %v1357
  %1374 = vst [vmem:[%s8 + $0x18] sm:$0xff] %v1358
  %1375 = vst [vmem:[%s8 + $0x20] sm:$0xff] %v1359
  %1376 = vst [vmem:[%s8 + $0x28] sm:$0xff] %v1360
  %1377 = vst [vmem:[%s8 + $0x30] sm:$0xff] %v1361
  %1378 = vst [vmem:[%s8 + $0x38] sm:$0xff] %v1362
  %1379 = vst [vmem:[%s8 + $0x40] sm:$0xff] %v1363
  %1380 = vst [vmem:[%s8 + $0x48] sm:$0xff] %v1364
  %1381 = vst [vmem:[%s8 + $0x50] sm:$0xff] %v1365
  %1382 = vst [vmem:[%s8 + $0x58] sm:$0xff] %v1366
  %1383 = vst [vmem:[%s8 + $0x60] sm:$0xff] %v1367
  %1384 = vst [vmem:[%s8 + $0x68] sm:$0xff] %v1368
  %1385 = vst [vmem:[%s8 + $0x70] sm:$0xff] %v1369
  %1386 = vst [vmem:[%s8 + $0x78] sm:$0xff] %v1370
  %v1387 = vld [vmem:[%s5] sm:$0xf]
  %v1388 = vld [vmem:[%s5 + $0x4] sm:$0xf]
  %v1389 = vld [vmem:[%s5 + $0x8] sm:$0xf]
  %v1390 = vld [vmem:[%s5 + $0xc] sm:$0xf]
  %v1391 = vld [vmem:[%s5 + $0x10] sm:$0xf]
  %v1392 = vld [vmem:[%s5 + $0x14] sm:$0xf]
  %v1393 = vld [vmem:[%s5 + $0x18] sm:$0xf]
  %v1394 = vld [vmem:[%s5 + $0x1c] sm:$0xf]
  %v1395 = vld [vmem:[%s5 + $0x20] sm:$0xf]
  %v1396 = vld [vmem:[%s5 + $0x24] sm:$0xf]
  %v1397 = vld [vmem:[%s5 + $0x28] sm:$0xf]
  %v1398 = vld [vmem:[%s5 + $0x2c] sm:$0xf]
  %v1399 = vld [vmem:[%s5 + $0x30] sm:$0xf]
  %v1400 = vld [vmem:[%s5 + $0x34] sm:$0xf]
  %v1401 = vld [vmem:[%s5 + $0x38] sm:$0xf]
  %v1402 = vld [vmem:[%s5 + $0x3c] sm:$0xf]
  %v1403 = vpack.c.bf16 %v1356, %v1355
  %v1404 = vpack.c.bf16 %v1358, %v1357
  %v1405 = vpack.c.bf16 %v1360, %v1359
  %v1406 = vpack.c.bf16 %v1362, %v1361
  %v1407 = vpack.c.bf16 %v1364, %v1363
  %v1408 = vpack.c.bf16 %v1366, %v1365
  %v1409 = vpack.c.bf16 %v1368, %v1367
  %v1410 = vpack.c.bf16 %v1370, %v1369
  %v1427 = vunpack.c.l.b16 %v1387
  %v1428 = vunpack.c.l.b16 %v1388
  %v1429 = vunpack.c.l.b16 %v1389
  %v1430 = vunpack.c.l.b16 %v1390
  %v1431 = vunpack.c.l.b16 %v1391
  %v1432 = vunpack.c.l.b16 %v1392
  %v1433 = vunpack.c.l.b16 %v1393
  %v1434 = vunpack.c.l.b16 %v1394
  %v1435 = vunpack.c.l.b16 %v1395
  %v1436 = vunpack.c.l.b16 %v1396
  %v1437 = vunpack.c.l.b16 %v1397
  %v1438 = vunpack.c.l.b16 %v1398
  %v1439 = vunpack.c.l.b16 %v1399
  %v1440 = vunpack.c.l.b16 %v1400
  %v1441 = vunpack.c.l.b16 %v1401
  %v1442 = vunpack.c.l.b16 %v1402
  %v1443 = vpack.c.b16 %v1428, %v1427
  %v1444 = vpack.c.b16 %v1430, %v1429
  %v1445 = vpack.c.b16 %v1432, %v1431
  %v1446 = vpack.c.b16 %v1434, %v1433
  %v1447 = vpack.c.b16 %v1436, %v1435
  %v1448 = vpack.c.b16 %v1438, %v1437
  %v1449 = vpack.c.b16 %v1440, %v1439
  %v1450 = vpack.c.b16 %v1442, %v1441
  %1459 = vmatprep.subr.bf16.mxu0 0
  %1460 = vmatpush1.bf16.msra.mxu0 %v1443
  %1461 = vmatprep.subr.bf16.mxu0 0
  %1462 = vmatpush1.bf16.msra.mxu0 %v1444
  %1463 = vmatprep.subr.bf16.mxu0 0
  %1464 = vmatpush1.bf16.msra.mxu0 %v1445
  %1465 = vmatprep.subr.bf16.mxu0 0
  %1466 = vmatpush1.bf16.msra.mxu0 %v1446
  %1467 = vmatprep.subr.bf16.mxu0 0
  %1468 = vmatpush1.bf16.msra.mxu0 %v1447
  %1469 = vmatprep.subr.bf16.mxu0 0
  %1470 = vmatpush1.bf16.msra.mxu0 %v1448
  %1471 = vmatprep.subr.bf16.mxu0 0
  %1472 = vmatpush1.bf16.msra.mxu0 %v1449
  %1473 = vmatprep.subr.bf16.mxu0 0
  %1474 = vmatpush1.bf16.msra.mxu0 %v1450
  %1475 = vmatprep.subr.bf16.mxu0 0
  %1476 = vmatpush1.bf16.msra.mxu0 0
  %1477 = vmatprep.subr.bf16.mxu0 0
  %1478 = vmatpush1.bf16.msra.mxu0 0
  %1479 = vmatprep.subr.bf16.mxu0 0
  %1480 = vmatpush1.bf16.msra.mxu0 0
  %1481 = vmatprep.subr.bf16.mxu0 0
  %1482 = vmatpush1.bf16.msra.mxu0 0
  %1483 = vmatprep.subr.bf16.mxu0 0
  %1484 = vmatpush1.bf16.msra.mxu0 0
  %1485 = vmatprep.subr.bf16.mxu0 0
  %1486 = vmatpush1.bf16.msra.mxu0 0
  %1487 = vmatprep.subr.bf16.mxu0 0
  %1488 = vmatpush1.bf16.msra.mxu0 0
  %1489 = vmatprep.subr.bf16.mxu0 0
  %1490 = vmatpush1.bf16.msra.mxu0 0
  %1491 = vmatprep.mubr.bf16.mxu0 0
  %1492 = vmatmul.mubr.bf16.gmra.mrb[0].mxu0 %v1403
  %v1493 = vpop.f32.mrb[0].mxu0
  %v1494 = vadd.f32 0.0, %v1493
  %v1495 = vpop.f32.mrb[0].mxu0
  %v1496 = vpop.f32.mrb[0].mxu0
  %v1497 = vadd.f32 0.0, %v1496
  %v1498 = vpop.f32.mrb[0].mxu0
  %1499 = vmatprep.mubr.bf16.mxu0 0
  %1500 = vmatmul.mubr.bf16.gmra.mrb[0].mxu0 %v1404
  %v1501 = vpop.f32.mrb[0].mxu0
  %v1502 = vadd.f32 0.0, %v1501
  %v1503 = vpop.f32.mrb[0].mxu0
  %v1504 = vpop.f32.mrb[0].mxu0
  %v1505 = vadd.f32 0.0, %v1504
  %v1506 = vpop.f32.mrb[0].mxu0
  %1507 = vmatprep.mubr.bf16.mxu0 0
  %1508 = vmatmul.mubr.bf16.gmra.mrb[0].mxu0 %v1405
  %v1509 = vpop.f32.mrb[0].mxu0
  %v1510 = vadd.f32 0.0, %v1509
  %v1511 = vpop.f32.mrb[0].mxu0
  %v1512 = vpop.f32.mrb[0].mxu0
  %v1513 = vadd.f32 0.0, %v1512
  %v1514 = vpop.f32.mrb[0].mxu0
  %1515 = vmatprep.mubr.bf16.mxu0 0
  %1516 = vmatmul.mubr.bf16.gmra.mrb[0].mxu0 %v1406
  %v1517 = vpop.f32.mrb[0].mxu0
  %v1518 = vadd.f32 0.0, %v1517
  %v1519 = vpop.f32.mrb[0].mxu0
  %v1520 = vpop.f32.mrb[0].mxu0
  %v1521 = vadd.f32 0.0, %v1520
  %v1522 = vpop.f32.mrb[0].mxu0
  %1523 = vmatprep.mubr.bf16.mxu0 0
  %1524 = vmatmul.mubr.bf16.gmra.mrb[0].mxu0 %v1407
  %v1525 = vpop.f32.mrb[0].mxu0
  %v1526 = vadd.f32 0.0, %v1525
  %v1527 = vpop.f32.mrb[0].mxu0
  %v1528 = vpop.f32.mrb[0].mxu0
  %v1529 = vadd.f32 0.0, %v1528
  %v1530 = vpop.f32.mrb[0].mxu0
  %1531 = vmatprep.mubr.bf16.mxu0 0
  %1532 = vmatmul.mubr.bf16.gmra.mrb[0].mxu0 %v1408
  %v1533 = vpop.f32.mrb[0].mxu0
  %v1534 = vadd.f32 0.0, %v1533
  %v1535 = vpop.f32.mrb[0].mxu0
  %v1536 = vpop.f32.mrb[0].mxu0
  %v1537 = vadd.f32 0.0, %v1536
  %v1538 = vpop.f32.mrb[0].mxu0
  %1539 = vmatprep.mubr.bf16.mxu0 0
  %1540 = vmatmul.mubr.bf16.gmra.mrb[0].mxu0 %v1409
  %v1541 = vpop.f32.mrb[0].mxu0
  %v1542 = vadd.f32 0.0, %v1541
  %v1543 = vpop.f32.mrb[0].mxu0
  %v1544 = vpop.f32.mrb[0].mxu0
  %v1545 = vadd.f32 0.0, %v1544
  %v1546 = vpop.f32.mrb[0].mxu0
  %1547 = vmatprep.mubr.bf16.mxu0 0
  %1548 = vmatmul.mubr.bf16.gmra.mrb[0].mxu0 %v1410
  %v1549 = vpop.f32.mrb[0].mxu0
  %v1550 = vadd.f32 0.0, %v1549
  %v1551 = vpop.f32.mrb[0].mxu0
  %v1552 = vpop.f32.mrb[0].mxu0
  %v1553 = vadd.f32 0.0, %v1552
  %v1554 = vpop.f32.mrb[0].mxu0
  %1555 = vdwg.mxu0
  %v1556 = vpack.c.bf16 %v1497, %v1494
  %v1557 = vpack.c.bf16 %v1505, %v1502
  %v1558 = vpack.c.bf16 %v1513, %v1510
  %v1559 = vpack.c.bf16 %v1521, %v1518
  %v1560 = vpack.c.bf16 %v1529, %v1526
  %v1561 = vpack.c.bf16 %v1537, %v1534
  %v1562 = vpack.c.bf16 %v1545, %v1542
  %v1563 = vpack.c.bf16 %v1553, %v1550
  %1564 = vmatprep.subr.bf16.mxu0 0
  %1565 = vmatpush1.bf16.msra.mxu0 %v1556
  %1566 = vmatprep.subr.bf16.mxu0 0
  %1567 = vmatpush1.bf16.msra.mxu0 %v1557
  %1568 = vmatprep.subr.bf16.mxu0 0
  %1569 = vmatpush1.bf16.msra.mxu0 %v1558
  %1570 = vmatprep.subr.bf16.mxu0 0
  %1571 = vmatpush1.bf16.msra.mxu0 %v1559
  %1572 = vmatprep.subr.bf16.mxu0 0
  %1573 = vmatpush1.bf16.msra.mxu0 %v1560
  %1574 = vmatprep.subr.bf16.mxu0 0
  %1575 = vmatpush1.bf16.msra.mxu0 %v1561
  %1576 = vmatprep.subr.bf16.mxu0 0
  %1577 = vmatpush1.bf16.msra.mxu0 %v1562
  %1578 = vmatprep.subr.bf16.mxu0 0
  %1579 = vmatpush1.bf16.msra.mxu0 %v1563
  %1580 = vmatprep.subr.bf16.mxu0 0
  %1581 = vmatpush1.bf16.msra.mxu0 0
  %1582 = vmatprep.subr.bf16.mxu0 0
  %1583 = vmatpush1.bf16.msra.mxu0 0
  %1584 = vmatprep.subr.bf16.mxu0 0
  %1585 = vmatpush1.bf16.msra.mxu0 0
  %1586 = vmatprep.subr.bf16.mxu0 0
  %1587 = vmatpush1.bf16.msra.mxu0 0
  %1588 = vmatprep.subr.bf16.mxu0 0
  %1589 = vmatpush1.bf16.msra.mxu0 0
  %1590 = vmatprep.subr.bf16.mxu0 0
  %1591 = vmatpush1.bf16.msra.mxu0 0
  %1592 = vmatprep.subr.bf16.mxu0 0
  %1593 = vmatpush1.bf16.msra.mxu0 0
  %1594 = vmatprep.subr.bf16.mxu0 0
  %1595 = vmatpush1.bf16.msra.mxu0 0
  %1596 = vmatprep.mubr.bf16.mxu0 0
  %1597 = vmatmul.mubr.bf16.gmra.mrb[0].mxu0 %v396
  %v1598 = vpop.f32.mrb[0].mxu0
  %v1599 = vadd.f32 0.0, %v1598
  %v1600 = vpop.f32.mrb[0].mxu0
  %v1601 = vpop.f32.mrb[0].mxu0
  %v1602 = vadd.f32 0.0, %v1601
  %v1603 = vpop.f32.mrb[0].mxu0
  %1604 = vmatprep.mubr.bf16.mxu0 0
  %1605 = vmatmul.mubr.bf16.gmra.mrb[0].mxu0 %v397
  %v1606 = vpop.f32.mrb[0].mxu0
  %v1607 = vadd.f32 0.0, %v1606
  %v1608 = vpop.f32.mrb[0].mxu0
  %v1609 = vpop.f32.mrb[0].mxu0
  %v1610 = vadd.f32 0.0, %v1609
  %v1611 = vpop.f32.mrb[0].mxu0
  %1612 = vmatprep.mubr.bf16.mxu0 0
  %1613 = vmatmul.mubr.bf16.gmra.mrb[0].mxu0 %v398
  %v1614 = vpop.f32.mrb[0].mxu0
  %v1615 = vadd.f32 0.0, %v1614
  %v1616 = vpop.f32.mrb[0].mxu0
  %v1617 = vpop.f32.mrb[0].mxu0
  %v1618 = vadd.f32 0.0, %v1617
  %v1619 = vpop.f32.mrb[0].mxu0
  %1620 = vmatprep.mubr.bf16.mxu0 0
  %1621 = vmatmul.mubr.bf16.gmra.mrb[0].mxu0 %v399
  %v1622 = vpop.f32.mrb[0].mxu0
  %v1623 = vadd.f32 0.0, %v1622
  %v1624 = vpop.f32.mrb[0].mxu0
  %v1625 = vpop.f32.mrb[0].mxu0
  %v1626 = vadd.f32 0.0, %v1625
  %v1627 = vpop.f32.mrb[0].mxu0
  %1628 = vmatprep.mubr.bf16.mxu0 0
  %1629 = vmatmul.mubr.bf16.gmra.mrb[0].mxu0 %v400
  %v1630 = vpop.f32.mrb[0].mxu0
  %v1631 = vadd.f32 0.0, %v1630
  %v1632 = vpop.f32.mrb[0].mxu0
  %v1633 = vpop.f32.mrb[0].mxu0
  %v1634 = vadd.f32 0.0, %v1633
  %v1635 = vpop.f32.mrb[0].mxu0
  %1636 = vmatprep.mubr.bf16.mxu0 0
  %1637 = vmatmul.mubr.bf16.gmra.mrb[0].mxu0 %v401
  %v1638 = vpop.f32.mrb[0].mxu0
  %v1639 = vadd.f32 0.0, %v1638
  %v1640 = vpop.f32.mrb[0].mxu0
  %v1641 = vpop.f32.mrb[0].mxu0
  %v1642 = vadd.f32 0.0, %v1641
  %v1643 = vpop.f32.mrb[0].mxu0
  %1644 = vmatprep.mubr.bf16.mxu0 0
  %1645 = vmatmul.mubr.bf16.gmra.mrb[0].mxu0 %v402
  %v1646 = vpop.f32.mrb[0].mxu0
  %v1647 = vadd.f32 0.0, %v1646
  %v1648 = vpop.f32.mrb[0].mxu0
  %v1649 = vpop.f32.mrb[0].mxu0
  %v1650 = vadd.f32 0.0, %v1649
  %v1651 = vpop.f32.mrb[0].mxu0
  %1652 = vmatprep.mubr.bf16.mxu0 0
  %1653 = vmatmul.mubr.bf16.gmra.mrb[0].mxu0 %v403
  %v1654 = vpop.f32.mrb[0].mxu0
  %v1655 = vadd.f32 0.0, %v1654
  %v1656 = vpop.f32.mrb[0].mxu0
  %v1657 = vpop.f32.mrb[0].mxu0
  %v1658 = vadd.f32 0.0, %v1657
  %v1659 = vpop.f32.mrb[0].mxu0
  %1660 = vdwg.mxu0
  %1661 = vmatprep.subr.bf16.mxu0 0
  %1662 = vmatpush1.bf16.msra.mxu0 %v1556
  %1663 = vmatprep.subr.bf16.mxu0 0
  %1664 = vmatpush1.bf16.msra.mxu0 %v1557
  %1665 = vmatprep.subr.bf16.mxu0 0
  %1666 = vmatpush1.bf16.msra.mxu0 %v1558
  %1667 = vmatprep.subr.bf16.mxu0 0
  %1668 = vmatpush1.bf16.msra.mxu0 %v1559
  %1669 = vmatprep.subr.bf16.mxu0 0
  %1670 = vmatpush1.bf16.msra.mxu0 %v1560
  %1671 = vmatprep.subr.bf16.mxu0 0
  %1672 = vmatpush1.bf16.msra.mxu0 %v1561
  %1673 = vmatprep.subr.bf16.mxu0 0
  %1674 = vmatpush1.bf16.msra.mxu0 %v1562
  %1675 = vmatprep.subr.bf16.mxu0 0
  %1676 = vmatpush1.bf16.msra.mxu0 %v1563
  %1677 = vmatprep.subr.bf16.mxu0 0
  %1678 = vmatpush1.bf16.msra.mxu0 0
  %1679 = vmatprep.subr.bf16.mxu0 0
  %1680 = vmatpush1.bf16.msra.mxu0 0
  %1681 = vmatprep.subr.bf16.mxu0 0
  %1682 = vmatpush1.bf16.msra.mxu0 0
  %1683 = vmatprep.subr.bf16.mxu0 0
  %1684 = vmatpush1.bf16.msra.mxu0 0
  %1685 = vmatprep.subr.bf16.mxu0 0
  %1686 = vmatpush1.bf16.msra.mxu0 0
  %1687 = vmatprep.subr.bf16.mxu0 0
  %1688 = vmatpush1.bf16.msra.mxu0 0
  %1689 = vmatprep.subr.bf16.mxu0 0
  %1690 = vmatpush1.bf16.msra.mxu0 0
  %1691 = vmatprep.subr.bf16.mxu0 0
  %1692 = vmatpush1.bf16.msra.mxu0 0
  %1693 = vmatprep.mubr.bf16.mxu0 0
  %1694 = vmatmul.mubr.bf16.gmra.mrb[0].mxu0 %v533
  %v1695 = vpop.f32.mrb[0].mxu0
  %v1696 = vadd.f32 0.0, %v1695
  %v1697 = vpop.f32.mrb[0].mxu0
  %v1698 = vpop.f32.mrb[0].mxu0
  %v1699 = vadd.f32 0.0, %v1698
  %v1700 = vpop.f32.mrb[0].mxu0
  %1701 = vmatprep.mubr.bf16.mxu0 0
  %1702 = vmatmul.mubr.bf16.gmra.mrb[0].mxu0 %v534
  %v1703 = vpop.f32.mrb[0].mxu0
  %v1704 = vadd.f32 0.0, %v1703
  %v1705 = vpop.f32.mrb[0].mxu0
  %v1706 = vpop.f32.mrb[0].mxu0
  %v1707 = vadd.f32 0.0, %v1706
  %v1708 = vpop.f32.mrb[0].mxu0
  %1709 = vmatprep.mubr.bf16.mxu0 0
  %1710 = vmatmul.mubr.bf16.gmra.mrb[0].mxu0 %v535
  %v1711 = vpop.f32.mrb[0].mxu0
  %v1712 = vadd.f32 0.0, %v1711
  %v1713 = vpop.f32.mrb[0].mxu0
  %v1714 = vpop.f32.mrb[0].mxu0
  %v1715 = vadd.f32 0.0, %v1714
  %v1716 = vpop.f32.mrb[0].mxu0
  %1717 = vmatprep.mubr.bf16.mxu0 0
  %1718 = vmatmul.mubr.bf16.gmra.mrb[0].mxu0 %v536
  %v1719 = vpop.f32.mrb[0].mxu0
  %v1720 = vadd.f32 0.0, %v1719
  %v1721 = vpop.f32.mrb[0].mxu0
  %v1722 = vpop.f32.mrb[0].mxu0
  %v1723 = vadd.f32 0.0, %v1722
  %v1724 = vpop.f32.mrb[0].mxu0
  %1725 = vmatprep.mubr.bf16.mxu0 0
  %1726 = vmatmul.mubr.bf16.gmra.mrb[0].mxu0 %v537
  %v1727 = vpop.f32.mrb[0].mxu0
  %v1728 = vadd.f32 0.0, %v1727
  %v1729 = vpop.f32.mrb[0].mxu0
  %v1730 = vpop.f32.mrb[0].mxu0
  %v1731 = vadd.f32 0.0, %v1730
  %v1732 = vpop.f32.mrb[0].mxu0
  %1733 = vmatprep.mubr.bf16.mxu0 0
  %1734 = vmatmul.mubr.bf16.gmra.mrb[0].mxu0 %v538
  %v1735 = vpop.f32.mrb[0].mxu0
  %v1736 = vadd.f32 0.0, %v1735
  %v1737 = vpop.f32.mrb[0].mxu0
  %v1738 = vpop.f32.mrb[0].mxu0
  %v1739 = vadd.f32 0.0, %v1738
  %v1740 = vpop.f32.mrb[0].mxu0
  %1741 = vmatprep.mubr.bf16.mxu0 0
  %1742 = vmatmul.mubr.bf16.gmra.mrb[0].mxu0 %v539
  %v1743 = vpop.f32.mrb[0].mxu0
  %v1744 = vadd.f32 0.0, %v1743
  %v1745 = vpop.f32.mrb[0].mxu0
  %v1746 = vpop.f32.mrb[0].mxu0
  %v1747 = vadd.f32 0.0, %v1746
  %v1748 = vpop.f32.mrb[0].mxu0
  %1749 = vmatprep.mubr.bf16.mxu0 0
  %1750 = vmatmul.mubr.bf16.gmra.mrb[0].mxu0 %v540
  %v1751 = vpop.f32.mrb[0].mxu0
  %v1752 = vadd.f32 0.0, %v1751
  %v1753 = vpop.f32.mrb[0].mxu0
  %v1754 = vpop.f32.mrb[0].mxu0
  %v1755 = vadd.f32 0.0, %v1754
  %v1756 = vpop.f32.mrb[0].mxu0
  %1757 = vdwg.mxu0
  %v1758 = vmul.f32 %v1599, 0.7
  %v1759 = vmul.f32 %v1602, 0.7
  %v1760 = vmul.f32 %v1607, 0.7
  %v1761 = vmul.f32 %v1610, 0.7
  %v1762 = vmul.f32 %v1615, 0.7
  %v1763 = vmul.f32 %v1618, 0.7
  %v1764 = vmul.f32 %v1623, 0.7
  %v1765 = vmul.f32 %v1626, 0.7
  %v1766 = vmul.f32 %v1631, 0.7
  %v1767 = vmul.f32 %v1634, 0.7
  %v1768 = vmul.f32 %v1639, 0.7
  %v1769 = vmul.f32 %v1642, 0.7
  %v1770 = vmul.f32 %v1647, 0.7
  %v1771 = vmul.f32 %v1650, 0.7
  %v1772 = vmul.f32 %v1655, 0.7
  %v1773 = vmul.f32 %v1658, 0.7
  %v1774 = vpack.c.bf16 %v1759, %v1758
  %v1775 = vpack.c.bf16 %v1761, %v1760
  %v1776 = vpack.c.bf16 %v1763, %v1762
  %v1777 = vpack.c.bf16 %v1765, %v1764
  %v1778 = vpack.c.bf16 %v1767, %v1766
  %v1779 = vpack.c.bf16 %v1769, %v1768
  %v1780 = vpack.c.bf16 %v1771, %v1770
  %v1781 = vpack.c.bf16 %v1773, %v1772
  %v1782 = vmul.f32 %v1696, 0.3
  %v1783 = vmul.f32 %v1699, 0.3
  %v1784 = vmul.f32 %v1704, 0.3
  %v1785 = vmul.f32 %v1707, 0.3
  %v1786 = vmul.f32 %v1712, 0.3
  %v1787 = vmul.f32 %v1715, 0.3
  %v1788 = vmul.f32 %v1720, 0.3
  %v1789 = vmul.f32 %v1723, 0.3
  %v1790 = vmul.f32 %v1728, 0.3
  %v1791 = vmul.f32 %v1731, 0.3
  %v1792 = vmul.f32 %v1736, 0.3
  %v1793 = vmul.f32 %v1739, 0.3
  %v1794 = vmul.f32 %v1744, 0.3
  %v1795 = vmul.f32 %v1747, 0.3
  %v1796 = vmul.f32 %v1752, 0.3
  %v1797 = vmul.f32 %v1755, 0.3
  %1798 = vmatprep.subr.bf16.mxu0 0
  %1799 = vmatpush1.bf16.msra.mxu0 %v1774
  %1800 = vmatprep.subr.bf16.mxu0 0
  %1801 = vmatpush1.bf16.msra.mxu0 %v1775
  %1802 = vmatprep.subr.bf16.mxu0 0
  %1803 = vmatpush1.bf16.msra.mxu0 %v1776
  %1804 = vmatprep.subr.bf16.mxu0 0
  %1805 = vmatpush1.bf16.msra.mxu0 %v1777
  %1806 = vmatprep.subr.bf16.mxu0 0
  %1807 = vmatpush1.bf16.msra.mxu0 %v1778
  %1808 = vmatprep.subr.bf16.mxu0 0
  %1809 = vmatpush1.bf16.msra.mxu0 %v1779
  %1810 = vmatprep.subr.bf16.mxu0 0
  %1811 = vmatpush1.bf16.msra.mxu0 %v1780
  %1812 = vmatprep.subr.bf16.mxu0 0
  %1813 = vmatpush1.bf16.msra.mxu0 %v1781
  %1814 = vmatprep.subr.bf16.mxu0 0
  %1815 = vmatpush1.bf16.msra.mxu0 0
  %1816 = vmatprep.subr.bf16.mxu0 0
  %1817 = vmatpush1.bf16.msra.mxu0 0
  %1818 = vmatprep.subr.bf16.mxu0 0
  %1819 = vmatpush1.bf16.msra.mxu0 0
  %1820 = vmatprep.subr.bf16.mxu0 0
  %1821 = vmatpush1.bf16.msra.mxu0 0
  %1822 = vmatprep.subr.bf16.mxu0 0
  %1823 = vmatpush1.bf16.msra.mxu0 0
  %1824 = vmatprep.subr.bf16.mxu0 0
  %1825 = vmatpush1.bf16.msra.mxu0 0
  %1826 = vmatprep.subr.bf16.mxu0 0
  %1827 = vmatpush1.bf16.msra.mxu0 0
  %1828 = vmatprep.subr.bf16.mxu0 0
  %1829 = vmatpush1.bf16.msra.mxu0 0
  %1830 = vmatprep.mubr.bf16.mxu0 0
  %1831 = vmatmul.mubr.bf16.gmra.mrb[0].mxu0 %v171
  %v1832 = vpop.f32.mrb[0].mxu0
  %v1833 = vadd.f32 %v1782, %v1832
  %v1834 = vpop.f32.mrb[0].mxu0
  %v1835 = vpop.f32.mrb[0].mxu0
  %v1836 = vadd.f32 %v1783, %v1835
  %v1837 = vpop.f32.mrb[0].mxu0
  %1838 = vmatprep.mubr.bf16.mxu0 0
  %1839 = vmatmul.mubr.bf16.gmra.mrb[0].mxu0 %v172
  %v1840 = vpop.f32.mrb[0].mxu0
  %v1841 = vadd.f32 %v1784, %v1840
  %v1842 = vpop.f32.mrb[0].mxu0
  %v1843 = vpop.f32.mrb[0].mxu0
  %v1844 = vadd.f32 %v1785, %v1843
  %v1845 = vpop.f32.mrb[0].mxu0
  %1846 = vmatprep.mubr.bf16.mxu0 0
  %1847 = vmatmul.mubr.bf16.gmra.mrb[0].mxu0 %v173
  %v1848 = vpop.f32.mrb[0].mxu0
  %v1849 = vadd.f32 %v1786, %v1848
  %v1850 = vpop.f32.mrb[0].mxu0
  %v1851 = vpop.f32.mrb[0].mxu0
  %v1852 = vadd.f32 %v1787, %v1851
  %v1853 = vpop.f32.mrb[0].mxu0
  %1854 = vmatprep.mubr.bf16.mxu0 0
  %1855 = vmatmul.mubr.bf16.gmra.mrb[0].mxu0 %v174
  %v1856 = vpop.f32.mrb[0].mxu0
  %v1857 = vadd.f32 %v1788, %v1856
  %v1858 = vpop.f32.mrb[0].mxu0
  %v1859 = vpop.f32.mrb[0].mxu0
  %v1860 = vadd.f32 %v1789, %v1859
  %v1861 = vpop.f32.mrb[0].mxu0
  %1862 = vmatprep.mubr.bf16.mxu0 0
  %1863 = vmatmul.mubr.bf16.gmra.mrb[0].mxu0 %v175
  %v1864 = vpop.f32.mrb[0].mxu0
  %v1865 = vadd.f32 %v1790, %v1864
  %v1866 = vpop.f32.mrb[0].mxu0
  %v1867 = vpop.f32.mrb[0].mxu0
  %v1868 = vadd.f32 %v1791, %v1867
  %v1869 = vpop.f32.mrb[0].mxu0
  %1870 = vmatprep.mubr.bf16.mxu0 0
  %1871 = vmatmul.mubr.bf16.gmra.mrb[0].mxu0 %v176
  %v1872 = vpop.f32.mrb[0].mxu0
  %v1873 = vadd.f32 %v1792, %v1872
  %v1874 = vpop.f32.mrb[0].mxu0
  %v1875 = vpop.f32.mrb[0].mxu0
  %v1876 = vadd.f32 %v1793, %v1875
  %v1877 = vpop.f32.mrb[0].mxu0
  %1878 = vmatprep.mubr.bf16.mxu0 0
  %1879 = vmatmul.mubr.bf16.gmra.mrb[0].mxu0 %v177
  %v1880 = vpop.f32.mrb[0].mxu0
  %v1881 = vadd.f32 %v1794, %v1880
  %v1882 = vpop.f32.mrb[0].mxu0
  %v1883 = vpop.f32.mrb[0].mxu0
  %v1884 = vadd.f32 %v1795, %v1883
  %v1885 = vpop.f32.mrb[0].mxu0
  %1886 = vmatprep.mubr.bf16.mxu0 0
  %1887 = vmatmul.mubr.bf16.gmra.mrb[0].mxu0 %v178
  %v1888 = vpop.f32.mrb[0].mxu0
  %v1889 = vadd.f32 %v1796, %v1888
  %v1890 = vpop.f32.mrb[0].mxu0
  %v1891 = vpop.f32.mrb[0].mxu0
  %v1892 = vadd.f32 %v1797, %v1891
  %v1893 = vpop.f32.mrb[0].mxu0
  %1894 = vdwg.mxu0
  %v1895 = vlaneseq
  %v1896 = vand.u32 %v1895, 127
  %vm1897 = vcmp.lt.s32.totalorder %v1896, 8
  %v1898 = vsel %vm1897, %v1833, -1e+30
  %v1899 = vsel %vm1897, %v1836, -1e+30
  %v1900 = vsel %vm1897, %v1841, -1e+30
  %v1901 = vsel %vm1897, %v1844, -1e+30
  %v1902 = vsel %vm1897, %v1849, -1e+30
  %v1903 = vsel %vm1897, %v1852, -1e+30
  %v1904 = vsel %vm1897, %v1857, -1e+30
  %v1905 = vsel %vm1897, %v1860, -1e+30
  %v1906 = vsel %vm1897, %v1865, -1e+30
  %v1907 = vsel %vm1897, %v1868, -1e+30
  %v1908 = vsel %vm1897, %v1873, -1e+30
  %v1909 = vsel %vm1897, %v1876, -1e+30
  %v1910 = vsel %vm1897, %v1881, -1e+30
  %v1911 = vsel %vm1897, %v1884, -1e+30
  %v1912 = vsel %vm1897, %v1889, -1e+30
  %v1913 = vsel %vm1897, %v1892, -1e+30
  %1914 = vmax.xlane.f32.xlu0 %v1898
  %v1915 = vpop.xlane.xlu0 %1914
  %1916 = vmax.xlane.f32.xlu0 %v1899
  %v1917 = vpop.xlane.xlu0 %1916
  %1918 = vmax.xlane.f32.xlu0 %v1900
  %v1919 = vpop.xlane.xlu0 %1918
  %1920 = vmax.xlane.f32.xlu0 %v1901
  %v1921 = vpop.xlane.xlu0 %1920
  %1922 = vmax.xlane.f32.xlu0 %v1902
  %v1923 = vpop.xlane.xlu0 %1922
  %1924 = vmax.xlane.f32.xlu0 %v1903
  %v1925 = vpop.xlane.xlu0 %1924
  %1926 = vmax.xlane.f32.xlu0 %v1904
  %v1927 = vpop.xlane.xlu0 %1926
  %1928 = vmax.xlane.f32.xlu0 %v1905
  %v1929 = vpop.xlane.xlu0 %1928
  %1930 = vmax.xlane.f32.xlu0 %v1906
  %v1931 = vpop.xlane.xlu0 %1930
  %1932 = vmax.xlane.f32.xlu0 %v1907
  %v1933 = vpop.xlane.xlu0 %1932
  %1934 = vmax.xlane.f32.xlu0 %v1908
  %v1935 = vpop.xlane.xlu0 %1934
  %1936 = vmax.xlane.f32.xlu0 %v1909
  %v1937 = vpop.xlane.xlu0 %1936
  %1938 = vmax.xlane.f32.xlu0 %v1910
  %v1939 = vpop.xlane.xlu0 %1938
  %1940 = vmax.xlane.f32.xlu0 %v1911
  %v1941 = vpop.xlane.xlu0 %1940
  %1942 = vmax.xlane.f32.xlu0 %v1912
  %v1943 = vpop.xlane.xlu0 %1942
  %1944 = vmax.xlane.f32.xlu0 %v1913
  %v1945 = vpop.xlane.xlu0 %1944
  %v1946 = vsub.f32 %v1898, %v1915
  %v1947 = vsub.f32 %v1899, %v1917
  %v1948 = vsub.f32 %v1900, %v1919
  %v1949 = vsub.f32 %v1901, %v1921
  %v1950 = vsub.f32 %v1902, %v1923
  %v1951 = vsub.f32 %v1903, %v1925
  %v1952 = vsub.f32 %v1904, %v1927
  %v1953 = vsub.f32 %v1905, %v1929
  %v1954 = vsub.f32 %v1906, %v1931
  %v1955 = vsub.f32 %v1907, %v1933
  %v1956 = vsub.f32 %v1908, %v1935
  %v1957 = vsub.f32 %v1909, %v1937
  %v1958 = vsub.f32 %v1910, %v1939
  %v1959 = vsub.f32 %v1911, %v1941
  %v1960 = vsub.f32 %v1912, %v1943
  %v1961 = vsub.f32 %v1913, %v1945
  %v1962 = vmul.f32 %v1946, 1.442695
  %v1963 = vpow.pop %v1962
  %v1964 = vmul.f32 %v1947, 1.442695
  %v1965 = vpow.pop %v1964
  %v1966 = vmul.f32 %v1948, 1.442695
  %v1967 = vpow.pop %v1966
  %v1968 = vmul.f32 %v1949, 1.442695
  %v1969 = vpow.pop %v1968
  %v1970 = vmul.f32 %v1950, 1.442695
  %v1971 = vpow.pop %v1970
  %v1972 = vmul.f32 %v1951, 1.442695
  %v1973 = vpow.pop %v1972
  %v1974 = vmul.f32 %v1952, 1.442695
  %v1975 = vpow.pop %v1974
  %v1976 = vmul.f32 %v1953, 1.442695
  %v1977 = vpow.pop %v1976
  %v1978 = vmul.f32 %v1954, 1.442695
  %v1979 = vpow.pop %v1978
  %v1980 = vmul.f32 %v1955, 1.442695
  %v1981 = vpow.pop %v1980
  %v1982 = vmul.f32 %v1956, 1.442695
  %v1983 = vpow.pop %v1982
  %v1984 = vmul.f32 %v1957, 1.442695
  %v1985 = vpow.pop %v1984
  %v1986 = vmul.f32 %v1958, 1.442695
  %v1987 = vpow.pop %v1986
  %v1988 = vmul.f32 %v1959, 1.442695
  %v1989 = vpow.pop %v1988
  %v1990 = vmul.f32 %v1960, 1.442695
  %v1991 = vpow.pop %v1990
  %v1992 = vmul.f32 %v1961, 1.442695
  %v1993 = vpow.pop %v1992
  %1994 = vadd.xlane.f32.xlu0 %v1963
  %v1995 = vpop.xlane.xlu0 %1994
  %1996 = vadd.xlane.f32.xlu0 %v1965
  %v1997 = vpop.xlane.xlu0 %1996
  %1998 = vadd.xlane.f32.xlu0 %v1967
  %v1999 = vpop.xlane.xlu0 %1998
  %2000 = vadd.xlane.f32.xlu0 %v1969
  %v2001 = vpop.xlane.xlu0 %2000
  %2002 = vadd.xlane.f32.xlu0 %v1971
  %v2003 = vpop.xlane.xlu0 %2002
  %2004 = vadd.xlane.f32.xlu0 %v1973
  %v2005 = vpop.xlane.xlu0 %2004
  %2006 = vadd.xlane.f32.xlu0 %v1975
  %v2007 = vpop.xlane.xlu0 %2006
  %2008 = vadd.xlane.f32.xlu0 %v1977
  %v2009 = vpop.xlane.xlu0 %2008
  %2010 = vadd.xlane.f32.xlu0 %v1979
  %v2011 = vpop.xlane.xlu0 %2010
  %2012 = vadd.xlane.f32.xlu0 %v1981
  %v2013 = vpop.xlane.xlu0 %2012
  %2014 = vadd.xlane.f32.xlu0 %v1983
  %v2015 = vpop.xlane.xlu0 %2014
  %2016 = vadd.xlane.f32.xlu0 %v1985
  %v2017 = vpop.xlane.xlu0 %2016
  %2018 = vadd.xlane.f32.xlu0 %v1987
  %v2019 = vpop.xlane.xlu0 %2018
  %2020 = vadd.xlane.f32.xlu0 %v1989
  %v2021 = vpop.xlane.xlu0 %2020
  %2022 = vadd.xlane.f32.xlu0 %v1991
  %v2023 = vpop.xlane.xlu0 %2022
  %2024 = vadd.xlane.f32.xlu0 %v1993
  %v2025 = vpop.xlane.xlu0 %2024
  %v2026 = vlog2.pop %v1995
  %v2027 = vmul.f32 %v2026, 0.6931472
  %v2028 = vlog2.pop %v1997
  %v2029 = vmul.f32 %v2028, 0.6931472
  %v2030 = vlog2.pop %v1999
  %v2031 = vmul.f32 %v2030, 0.6931472
  %v2032 = vlog2.pop %v2001
  %v2033 = vmul.f32 %v2032, 0.6931472
  %v2034 = vlog2.pop %v2003
  %v2035 = vmul.f32 %v2034, 0.6931472
  %v2036 = vlog2.pop %v2005
  %v2037 = vmul.f32 %v2036, 0.6931472
  %v2038 = vlog2.pop %v2007
  %v2039 = vmul.f32 %v2038, 0.6931472
  %v2040 = vlog2.pop %v2009
  %v2041 = vmul.f32 %v2040, 0.6931472
  %v2042 = vlog2.pop %v2011
  %v2043 = vmul.f32 %v2042, 0.6931472
  %v2044 = vlog2.pop %v2013
  %v2045 = vmul.f32 %v2044, 0.6931472
  %v2046 = vlog2.pop %v2015
  %v2047 = vmul.f32 %v2046, 0.6931472
  %v2048 = vlog2.pop %v2017
  %v2049 = vmul.f32 %v2048, 0.6931472
  %v2050 = vlog2.pop %v2019
  %v2051 = vmul.f32 %v2050, 0.6931472
  %v2052 = vlog2.pop %v2021
  %v2053 = vmul.f32 %v2052, 0.6931472
  %v2054 = vlog2.pop %v2023
  %v2055 = vmul.f32 %v2054, 0.6931472
  %v2056 = vlog2.pop %v2025
  %v2057 = vmul.f32 %v2056, 0.6931472
  %v2058 = vsub.f32 %v1946, %v2027
  %v2059 = vsub.f32 %v1947, %v2029
  %v2060 = vsub.f32 %v1948, %v2031
  %v2061 = vsub.f32 %v1949, %v2033
  %v2062 = vsub.f32 %v1950, %v2035
  %v2063 = vsub.f32 %v1951, %v2037
  %v2064 = vsub.f32 %v1952, %v2039
  %v2065 = vsub.f32 %v1953, %v2041
  %v2066 = vsub.f32 %v1954, %v2043
  %v2067 = vsub.f32 %v1955, %v2045
  %v2068 = vsub.f32 %v1956, %v2047
  %v2069 = vsub.f32 %v1957, %v2049
  %v2070 = vsub.f32 %v1958, %v2051
  %v2071 = vsub.f32 %v1959, %v2053
  %v2072 = vsub.f32 %v1960, %v2055
  %v2073 = vsub.f32 %v1961, %v2057
  %2074 = vst [vmem:[%s9] sm:$0xff] %v2058
  %2075 = vst [vmem:[%s9 + $0x8] sm:$0xff] %v2059
  %2076 = vst [vmem:[%s9 + $0x10] sm:$0xff] %v2060
  %2077 = vst [vmem:[%s9 + $0x18] sm:$0xff] %v2061
  %2078 = vst [vmem:[%s9 + $0x20] sm:$0xff] %v2062
  %2079 = vst [vmem:[%s9 + $0x28] sm:$0xff] %v2063
  %2080 = vst [vmem:[%s9 + $0x30] sm:$0xff] %v2064
  %2081 = vst [vmem:[%s9 + $0x38] sm:$0xff] %v2065
  %2082 = vst [vmem:[%s9 + $0x40] sm:$0xff] %v2066
  %2083 = vst [vmem:[%s9 + $0x48] sm:$0xff] %v2067
  %2084 = vst [vmem:[%s9 + $0x50] sm:$0xff] %v2068
  %2085 = vst [vmem:[%s9 + $0x58] sm:$0xff] %v2069
  %2086 = vst [vmem:[%s9 + $0x60] sm:$0xff] %v2070
  %2087 = vst [vmem:[%s9 + $0x68] sm:$0xff] %v2071
  %2088 = vst [vmem:[%s9 + $0x70] sm:$0xff] %v2072
  %2089 = vst [vmem:[%s9 + $0x78] sm:$0xff] %v2073
  // Predicated region
  $region26: #{anchor_gcn2_forward.1} parent=0 // pred_check
    _
  $region27: #{anchor_gcn2_forward.1} parent=0 // pred_check_branch
    %2091 = sbr.rel (0) target = $region29
  $region28: #{anchor_gcn2_forward.1} parent=0 // pred_region
    _
  $region29: #{anchor_gcn2_forward.1} parent=0 // pred_fallthru
    _
  // Predicated region
  $region30: #{anchor_gcn2_forward.1} parent=0 // pred_check
    _
  $region31: #{anchor_gcn2_forward.1} parent=0 // pred_check_branch
    %2093 = sbr.rel (0) target = $region33
  $region32: #{anchor_gcn2_forward.1} parent=0 // pred_region
    _
  $region33: #{anchor_gcn2_forward.1} parent=0 // pred_fallthru
    _
  // Predicated region
  $region34: #{anchor_gcn2_forward.1} parent=0 // pred_check
    _
  $region35: #{anchor_gcn2_forward.1} parent=0 // pred_check_branch
    %2095 = sbr.rel (0) target = $region37
  $region36: #{anchor_gcn2_forward.1} parent=0 // pred_region
    _
  $region37: #{anchor_gcn2_forward.1} parent=0 // pred_fallthru
    _
  // Predicated region
  $region38: #{anchor_gcn2_forward.1} parent=0 // pred_check
    _
  $region39: #{anchor_gcn2_forward.1} parent=0 // pred_check_branch
    %2097 = sbr.rel (0) target = $region41
  $region40: #{anchor_gcn2_forward.1} parent=0 // pred_region
    _
  $region41: #{anchor_gcn2_forward.1} parent=0 // pred_fallthru
    _
  // Predicated region
  $region42: #{anchor_gcn2_forward.1} parent=0 // pred_check
    _
  $region43: #{anchor_gcn2_forward.1} parent=0 // pred_check_branch
    %2099 = sbr.rel (0) target = $region45
  $region44: #{anchor_gcn2_forward.1} parent=0 // pred_region
    _
  $region45: #{anchor_gcn2_forward.1} parent=0 // pred_fallthru
    _
  // Predicated region
  $region46: #{anchor_gcn2_forward.1} parent=0 // pred_check
    _
  $region47: #{anchor_gcn2_forward.1} parent=0 // pred_check_branch
    %2101 = sbr.rel (0) target = $region49
  $region48: #{anchor_gcn2_forward.1} parent=0 // pred_region
    _
  $region49: #{anchor_gcn2_forward.1} parent=0 // pred_fallthru
    _
  // Predicated region
  $region50: #{anchor_gcn2_forward.1} parent=0 // pred_check
    _
  $region51: #{anchor_gcn2_forward.1} parent=0 // pred_check_branch
    %2103 = sbr.rel (0) target = $region53
  $region52: #{anchor_gcn2_forward.1} parent=0 // pred_region
    _
  $region53: #{anchor_gcn2_forward.1} parent=0 // pred_fallthru
    _
  // Predicated region
  $region54: #{anchor_gcn2_forward.1} parent=0 // pred_check
    _
  $region55: #{anchor_gcn2_forward.1} parent=0 // pred_check_branch
    %2105 = sbr.rel (0) target = $region57
  $region56: #{anchor_gcn2_forward.1} parent=0 // pred_region
    _
  $region57: #{anchor_gcn2_forward.1} parent=0 // pred_fallthru
    _

</llo_original>
